<compile_context>
chip_gen: v7x
topology: tpu7x:2x2x1
jax: 0.10.0
libtpu: 0.0.40
codegen_flags: <defaults>
</compile_context>

<pallas_src>
import functools

import jax
import jax.numpy as jnp
from jax import lax
from jax.experimental import pallas as pl
from jax.experimental.pallas import tpu as pltpu

EMBED_DIM = 32
NUM_HEADS = 4
HEAD_DIM = EMBED_DIM // NUM_HEADS      # 8
NUM_LAYERS = 2
FF_DIM = 128
NUM_CLASSES = 1
LN_EPS = 1e-5
LANE = 128                             # lane-dense fc-head output width
QKV_LANES = 128                        # 3*E = 96 q|k|v columns padded to one slab


def _round_up(v, m):
    return ((v + m - 1) // m) * m


def _vmem_capacity():
    try:
        return int(pltpu.get_tpu_info().vmem_capacity_bytes)
    except Exception:
        return 64 * 1024 * 1024


def _vmem_limit_bytes():
    cap = _vmem_capacity()
    return min(3 * cap // 4, 96 * 1024 * 1024)


def _tiling(seq_len):
    """Query-tile size & padded sequence length for the tiled (S > 128) path."""
    # 128 MiB parts (v5e/v6e): bigger query tiles -> fewer grid steps.
    # 64 MiB parts (v7x): TQ=128 keeps >=2 grid steps for the 2 TensorCores and
    # keeps per-step score buffers small.
    tq = 128 if _vmem_capacity() <= 64 * 1024 * 1024 else 256
    return tq, _round_up(seq_len, tq)


def _auto_key_chunk(s_pad, tq):
    """Key-chunk size for the online-softmax loop, or None for one-shot softmax.

    The one-shot (H, TQ, S_pad) f32 score tensor costs 4*TQ*S_pad*4 bytes per
    grid step; chunk keys once it stops fitting comfortably in this
    generation's VMEM."""
    one_shot_max = 2048 if _vmem_capacity() <= 64 * 1024 * 1024 else 4096
    if s_pad <= one_shot_max:
        return None
    chunk = tq
    while chunk * 2 <= one_shot_max and s_pad % (chunk * 2) == 0:
        chunk *= 2
    return chunk


# --------------------------- shared in-kernel math -------------------------- #

def _layernorm(y, w, b):
    mu = jnp.mean(y, axis=-1, keepdims=True)
    var = jnp.mean(jnp.square(y - mu), axis=-1, keepdims=True)
    return (y - mu) * lax.rsqrt(var + LN_EPS) * w + b


def _qkv_project(x_f32, wqkv_bf16, bqkv_f32):
    """Single lane-dense (E, 128) QKV matmul; columns = [q*scale | k | v | 0]."""
    return (jnp.dot(x_f32.astype(jnp.bfloat16), wqkv_bf16,
                    preferred_element_type=jnp.float32) + bqkv_f32)


def _split_qkv_heads(qkv_f32):
    """(s, 128) f32 QKV slab -> three head-major (H, s, D) bf16 tensors.

    Uses static lane slices + a leading-axis stack (no 3-D reshapes/transposes,
    no broadcast of the sequence)."""
    qkv_bf = qkv_f32.astype(jnp.bfloat16)

    def heads(base):
        return jnp.stack(
            [qkv_bf[:, base + h * HEAD_DIM: base + (h + 1) * HEAD_DIM]
             for h in range(NUM_HEADS)], axis=0)

    return heads(0), heads(EMBED_DIM), heads(2 * EMBED_DIM)


def _softmax_attention(qh, kh, vh, seq_len, s_keys):
    """One-shot softmax attention.  qh (H,TQ,D), kh/vh (H,S,D), all bf16."""
    s = jnp.einsum('hqd,hsd->hqs', qh, kh, preferred_element_type=jnp.float32)
    if s_keys > seq_len:                          # static: mask padded key rows
        key_idx = lax.broadcasted_iota(jnp.int32, (1, 1, s_keys), 2)
        s = jnp.where(key_idx < seq_len, s, -1e30)
    s = s - jnp.max(s, axis=-1, keepdims=True)
    p = jnp.exp(s)
    p = p * pl.reciprocal(jnp.sum(p, axis=-1, keepdims=True), approx=True)
    return jnp.einsum('hqs,hsd->hqd', p.astype(jnp.bfloat16), vh,
                      preferred_element_type=jnp.float32)


def _flash_attention(qh, k_ref, v_ref, seq_len, key_chunk):
    """Key-chunked online-softmax attention against resident K/V VMEM refs."""
    h, tq, d = qh.shape
    s_pad = k_ref.shape[1]
    n_chunks = s_pad // key_chunk
    masked = s_pad > seq_len

    def body(c, carry):
        m, l, acc = carry
        off = pl.multiple_of(c * key_chunk, key_chunk)
        kc = k_ref[:, pl.ds(off, key_chunk), :]
        vc = v_ref[:, pl.ds(off, key_chunk), :]
        s = jnp.einsum('hqd,hsd->hqs', qh, kc, preferred_element_type=jnp.float32)
        if masked:
            key_idx = off + lax.broadcasted_iota(jnp.int32, (1, 1, key_chunk), 2)
            s = jnp.where(key_idx < seq_len, s, -1e30)
        m_new = jnp.maximum(m, jnp.max(s, axis=-1, keepdims=True))
        alpha = jnp.exp(m - m_new)
        p = jnp.exp(s - m_new)
        l_new = alpha * l + jnp.sum(p, axis=-1, keepdims=True)
        acc_new = alpha * acc + jnp.einsum('hqs,hsd->hqd', p.astype(jnp.bfloat16),
                                           vc, preferred_element_type=jnp.float32)
        return m_new, l_new, acc_new

    m0 = jnp.full((h, tq, 1), -1e30, jnp.float32)
    l0 = jnp.zeros((h, tq, 1), jnp.float32)
    a0 = jnp.zeros((h, tq, d), jnp.float32)
    _, l, acc = lax.fori_loop(0, n_chunks, body, (m0, l0, a0))
    return acc * pl.reciprocal(l, approx=True)


def _attn_out_ff(x_res, av, wo, vec, w1, b1, w2):
    """Head merge (folded into per-head out-proj slabs) + post-norm FFN block."""
    oh = jnp.einsum('hqd,hde->hqe', av.astype(jnp.bfloat16), wo,
                    preferred_element_type=jnp.float32)
    attn = jnp.sum(oh, axis=0) + vec[0:1, :]
    y = _layernorm(x_res + attn, vec[1:2, :], vec[2:3, :])
    h1 = jnp.maximum(jnp.dot(y.astype(jnp.bfloat16), w1,
                             preferred_element_type=jnp.float32) + b1, 0.0)
    ff = jnp.dot(h1.astype(jnp.bfloat16), w2,
                 preferred_element_type=jnp.float32) + vec[5:6, :]
    return _layernorm(y + ff, vec[3:4, :], vec[4:5, :])


# --------------------------------- kernels ---------------------------------- #

def fused_model_kernel(num_ref, emb_ref, wemb_ref, bemb_ref, wqkv_ref, bqkv_ref,
                       wo_ref, w1_ref, b1_ref, w2_ref, vecs_ref, fcw_ref,
                       fcb_ref, o_ref, *, seq_len):
    """Small-S path: embedding + both encoder layers + fc head in one kernel."""
    s_pad = num_ref.shape[0]
    x = (jnp.dot(num_ref[...].astype(jnp.bfloat16), wemb_ref[...],
                 preferred_element_type=jnp.float32)
         + bemb_ref[...] + emb_ref[...])
    for l in range(NUM_LAYERS):
        vec = vecs_ref[l]
        qkv = _qkv_project(x, wqkv_ref[l], bqkv_ref[l])
        qh, kh, vh = _split_qkv_heads(qkv)
        av = _softmax_attention(qh, kh, vh, seq_len, s_pad)
        x = _attn_out_ff(x, av, wo_ref[l], vec, w1_ref[l], b1_ref[l], w2_ref[l])
    o_ref[...] = (jnp.dot(x.astype(jnp.bfloat16), fcw_ref[...],
                          preferred_element_type=jnp.float32) + fcb_ref[...])


def embed_kernel(num_ref, embsum_ref, wemb_ref, bemb_ref, o_ref):
    o_ref[...] = (jnp.dot(num_ref[...].astype(jnp.bfloat16), wemb_ref[...],
                          preferred_element_type=jnp.float32)
                  + bemb_ref[...] + embsum_ref[...])


def qkv_project_kernel(x_ref, wqkv_ref, bqkv_ref, qh_ref, kh_ref, vh_ref):
    """Hoisted per-layer QKV projection: one lane-dense matmul per seq tile."""
    qkv = _qkv_project(x_ref[...], wqkv_ref[...], bqkv_ref[...])
    qh, kh, vh = _split_qkv_heads(qkv)
    qh_ref[...] = qh
    kh_ref[...] = kh
    vh_ref[...] = vh


def encoder_block_kernel(x_ref, q_ref, k_ref, v_ref, wo_ref, w1_ref, b1_ref,
                         w2_ref, vecs_ref, o_ref, *, seq_len, key_chunk):
    if key_chunk is None:
        av = _softmax_attention(q_ref[...], k_ref[...], v_ref[...],
                                seq_len, k_ref.shape[1])
    else:
        av = _flash_attention(q_ref[...], k_ref, v_ref, seq_len, key_chunk)
    o_ref[...] = _attn_out_ff(x_ref[...], av, wo_ref[...], vecs_ref[...],
                              w1_ref[...], b1_ref[...], w2_ref[...])


def encoder_block_head_kernel(x_ref, q_ref, k_ref, v_ref, wo_ref, w1_ref, b1_ref,
                              w2_ref, vecs_ref, fcw_ref, fcb_ref, o_ref, *,
                              seq_len, key_chunk):
    if key_chunk is None:
        av = _softmax_attention(q_ref[...], k_ref[...], v_ref[...],
                                seq_len, k_ref.shape[1])
    else:
        av = _flash_attention(q_ref[...], k_ref, v_ref, seq_len, key_chunk)
    y = _attn_out_ff(x_ref[...], av, wo_ref[...], vecs_ref[...],
                     w1_ref[...], b1_ref[...], w2_ref[...])
    o_ref[...] = (jnp.dot(y.astype(jnp.bfloat16), fcw_ref[...],
                          preferred_element_type=jnp.float32) + fcb_ref[...])


# -------------------------------- parameters -------------------------------- #

def init_params(key, input_dim, n_cat):
    """Random params in PyTorch-native layouts (weight = (out, in))."""
    F = input_dim - n_cat
    ks = jax.random.split(key, 16)

    def nrm(k, shape, s=0.1):
        return jax.random.normal(k, shape, jnp.float32) * s

    return dict(
        minute_tbl=nrm(ks[0], (60, EMBED_DIM), 1.0),
        second_tbl=nrm(ks[1], (60, EMBED_DIM), 1.0),
        micro_tbl=nrm(ks[2], (1000, EMBED_DIM), 1.0),
        embed_w=nrm(ks[3], (EMBED_DIM, F)),
        embed_b=nrm(ks[4], (EMBED_DIM,)),
        in_proj_w=nrm(ks[5], (NUM_LAYERS, 3 * EMBED_DIM, EMBED_DIM)),
        in_proj_b=nrm(ks[6], (NUM_LAYERS, 3 * EMBED_DIM)),
        out_proj_w=nrm(ks[7], (NUM_LAYERS, EMBED_DIM, EMBED_DIM)),
        out_proj_b=nrm(ks[8], (NUM_LAYERS, EMBED_DIM)),
        ln1_w=jnp.ones((NUM_LAYERS, EMBED_DIM), jnp.float32),
        ln1_b=jnp.zeros((NUM_LAYERS, EMBED_DIM), jnp.float32),
        ln2_w=jnp.ones((NUM_LAYERS, EMBED_DIM), jnp.float32),
        ln2_b=jnp.zeros((NUM_LAYERS, EMBED_DIM), jnp.float32),
        ff1_w=nrm(ks[9], (NUM_LAYERS, FF_DIM, EMBED_DIM)),
        ff1_b=nrm(ks[10], (NUM_LAYERS, FF_DIM)),
        ff2_w=nrm(ks[11], (NUM_LAYERS, EMBED_DIM, FF_DIM)),
        ff2_b=nrm(ks[12], (NUM_LAYERS, EMBED_DIM)),
        fc_w=nrm(ks[13], (NUM_CLASSES, EMBED_DIM)),
        fc_b=nrm(ks[14], (NUM_CLASSES,)),
    )


def prepare_params(raw):
    """PyTorch-layout params -> kernel layout: one lane-dense (E,128) QKV slab
    per layer (1/sqrt(D) folded into the q columns), bf16 weights, packed small
    vectors, lane-padded fc head."""
    E, H, D, L = EMBED_DIM, NUM_HEADS, HEAD_DIM, NUM_LAYERS
    scale = 1.0 / (D ** 0.5)
    bf = jnp.bfloat16

    F = raw["embed_w"].shape[1]
    F_pad = max(8, _round_up(F, 8))
    w_embed = jnp.zeros((F_pad, E), jnp.float32).at[:F, :].set(raw["embed_w"].T)

    wqkv, bqkv, wo, vecs, w1, b1, w2 = [], [], [], [], [], [], []
    for l in range(L):
        Wi, bi = raw["in_proj_w"][l], raw["in_proj_b"][l]
        Wq, Wk, Wv = Wi[:E], Wi[E:2 * E], Wi[2 * E:]
        bq, bk, bv = bi[:E], bi[E:2 * E], bi[2 * E:]
        w_slab = jnp.zeros((E, QKV_LANES), jnp.float32)
        w_slab = w_slab.at[:, 0:E].set(Wq.T * scale)
        w_slab = w_slab.at[:, E:2 * E].set(Wk.T)
        w_slab = w_slab.at[:, 2 * E:3 * E].set(Wv.T)
        b_slab = jnp.zeros((1, QKV_LANES), jnp.float32)
        b_slab = b_slab.at[0, 0:E].set(bq * scale)
        b_slab = b_slab.at[0, E:2 * E].set(bk)
        b_slab = b_slab.at[0, 2 * E:3 * E].set(bv)
        wqkv.append(w_slab)
        bqkv.append(b_slab)
        wo.append(raw["out_proj_w"][l].T.reshape(H, D, E))
        vecs.append(jnp.stack([raw["out_proj_b"][l], raw["ln1_w"][l],
                               raw["ln1_b"][l], raw["ln2_w"][l],
                               raw["ln2_b"][l], raw["ff2_b"][l]]))
        w1.append(raw["ff1_w"][l].T)          # (E, FF)
        b1.append(raw["ff1_b"][l][None, :])   # (1, FF)
        w2.append(raw["ff2_w"][l].T)          # (FF, E)

    fcw = jnp.zeros((E, LANE), jnp.float32).at[:, :NUM_CLASSES].set(raw["fc_w"].T)
    fcb = jnp.zeros((1, LANE), jnp.float32).at[0, :NUM_CLASSES].set(raw["fc_b"])

    return dict(
        minute_tbl=raw["minute_tbl"], second_tbl=raw["second_tbl"],
        micro_tbl=raw["micro_tbl"],
        w_embed=w_embed.astype(bf), b_embed=raw["embed_b"][None, :],
        wqkv=jnp.stack(wqkv).astype(bf),       # (L, E, 128) bf16
        bqkv=jnp.stack(bqkv),                  # (L, 1, 128) f32
        wo=jnp.stack(wo).astype(bf),           # (L, H, D, E) bf16
        vecs=jnp.stack(vecs),                  # (L, 6, E)    f32
        w1=jnp.stack(w1).astype(bf),           # (L, E, FF)   bf16
        b1=jnp.stack(b1),                      # (L, 1, FF)   f32
        w2=jnp.stack(w2).astype(bf),           # (L, FF, E)   bf16
        fcw=fcw.astype(bf), fcb=fcb,
    )


# ---------------------------------- wrapper --------------------------------- #

def _const_spec(shape):
    rank = len(shape)
    return pl.BlockSpec(shape, lambda i, _r=rank: (0,) * _r)


def transformer_forward(x, prep, cat_feats, input_dim, is_regression=True,
                        validate_time_ranges=False, attn_key_chunk="auto"):
    """x: (B, input_dim) f32. Returns (B,) if is_regression else (B, NUM_CLASSES)."""
    # Ordering contract mirrors the PyTorch forward:
    #   cat_feats[0] = minute, cat_feats[1] = microsecond, cat_feats[2] = second.
    assert len(cat_feats) == 3, "cat_feats must be [minute, microsecond, second]"
    num_feats = [i for i in range(input_dim) if i not in cat_feats]
    minute = x[:, cat_feats[0]].astype(jnp.int32)
    second = x[:, cat_feats[2]].astype(jnp.int32)
    micro = x[:, cat_feats[1]].astype(jnp.int32)

    if validate_time_ranges:
        # Mirrors the PyTorch ValueError guards.  Off by default: each
        # int(jnp.max(...)) is a device->host sync that dominates small-batch
        # latency.
        if int(jnp.max(minute)) >= 60 or int(jnp.min(minute)) < 0:
            raise ValueError("Minute values must be between 0-59")
        if int(jnp.max(second)) >= 60 or int(jnp.min(second)) < 0:
            raise ValueError("Second values must be between 0-59")
        if int(jnp.max(micro)) >= 1000 or int(jnp.min(micro)) < 0:
            raise ValueError("Millisecond values must be between 0-999")

    # Embedding-table gathers + numerical feature split: plain-JAX glue.
    emb_sum = (prep["minute_tbl"][minute] + prep["second_tbl"][second]
               + prep["micro_tbl"][micro])
    num_x = x[:, jnp.array(num_feats)].astype(jnp.float32)

    S = x.shape[0]                 # original batch acts as the sequence length
    E, H, D, FF, L = EMBED_DIM, NUM_HEADS, HEAD_DIM, FF_DIM, NUM_LAYERS
    F = num_x.shape[1]
    F_pad = prep["w_embed"].shape[0]
    vmem_limit = _vmem_limit_bytes()

    # ---------------- small-S: single fused pallas_call ---------------- #
    if S <= 128:
        s_pad = max(8, _round_up(S, 8))
        num_x = jnp.pad(num_x, ((0, s_pad - S), (0, F_pad - F)))
        emb_sum = jnp.pad(emb_sum, ((0, s_pad - S), (0, 0)))
        logits = pl.pallas_call(
            functools.partial(fused_model_kernel, seq_len=S),
            grid=(1,),
            in_specs=[_const_spec((s_pad, F_pad)), _const_spec((s_pad, E)),
                      _const_spec((F_pad, E)), _const_spec((1, E)),
                      _const_spec((L, E, QKV_LANES)), _const_spec((L, 1, QKV_LANES)),
                      _const_spec((L, H, D, E)), _const_spec((L, E, FF)),
                      _const_spec((L, 1, FF)), _const_spec((L, FF, E)),
                      _const_spec((L, 6, E)),
                      _const_spec((E, LANE)), _const_spec((1, LANE))],
            out_specs=_const_spec((s_pad, LANE)),
            out_shape=jax.ShapeDtypeStruct((s_pad, LANE), jnp.float32),
            compiler_params=pltpu.CompilerParams(
                dimension_semantics=("arbitrary",),
                vmem_limit_bytes=vmem_limit),
        )(num_x, emb_sum, prep["w_embed"], prep["b_embed"], prep["wqkv"],
          prep["bqkv"], prep["wo"], prep["w1"], prep["b1"], prep["w2"],
          prep["vecs"], prep["fcw"], prep["fcb"])
        out = logits[:S, :NUM_CLASSES]
        return out[:, 0] if is_regression else out

    # --------------------------- tiled (large-S) path --------------------------- #
    TQ, s_pad = _tiling(S)
    if attn_key_chunk == "auto":
        key_chunk = _auto_key_chunk(s_pad, TQ)
    else:
        key_chunk = attn_key_chunk
        if key_chunk is not None and (s_pad % key_chunk != 0 or key_chunk >= s_pad):
            key_chunk = None

    num_x = jnp.pad(num_x, ((0, s_pad - S), (0, F_pad - F)))
    emb_sum = jnp.pad(emb_sum, ((0, s_pad - S), (0, 0)))
    grid = (s_pad // TQ,)
    cparams = pltpu.CompilerParams(dimension_semantics=("parallel",),
                                   vmem_limit_bytes=vmem_limit)
    tile_spec = pl.BlockSpec((TQ, E), lambda i: (i, 0))
    head_tile_spec = pl.BlockSpec((H, TQ, D), lambda i: (0, i, 0))
    head_full_spec = _const_spec((H, s_pad, D))

    # --- embedding ---
    x_cur = pl.pallas_call(
        embed_kernel,
        grid=grid,
        in_specs=[pl.BlockSpec((TQ, F_pad), lambda i: (i, 0)), tile_spec,
                  _const_spec((F_pad, E)), _const_spec((1, E))],
        out_specs=tile_spec,
        out_shape=jax.ShapeDtypeStruct((s_pad, E), jnp.float32),
        compiler_params=cparams,
    )(num_x, emb_sum, prep["w_embed"], prep["b_embed"])

    logits = None
    for l in range(NUM_LAYERS):
        # (a) hoisted QKV projection: one lane-dense matmul per sequence tile,
        #     heads split once, K/V become resident bf16 inputs of (b).
        qh, kh, vh = pl.pallas_call(
            qkv_project_kernel,
            grid=grid,
            in_specs=[tile_spec, _const_spec((E, QKV_LANES)),
                      _const_spec((1, QKV_LANES))],
            out_specs=[head_tile_spec, head_tile_spec, head_tile_spec],
            out_shape=[jax.ShapeDtypeStruct((H, s_pad, D), jnp.bfloat16)] * 3,
            compiler_params=cparams,
        )(x_cur, prep["wqkv"][l], prep["bqkv"][l])

        # (b) attention (one-shot or key-chunked online softmax) + post-norm FFN.
        common_specs = [tile_spec, head_tile_spec, head_full_spec, head_full_spec,
                        _const_spec((H, D, E)), _const_spec((E, FF)),
                        _const_spec((1, FF)), _const_spec((FF, E)),
                        _const_spec((6, E))]
        args = (x_cur, qh, kh, vh, prep["wo"][l], prep["w1"][l], prep["b1"][l],
                prep["w2"][l], prep["vecs"][l])
        if l < NUM_LAYERS - 1:
            x_cur = pl.pallas_call(
                functools.partial(encoder_block_kernel, seq_len=S,
                                  key_chunk=key_chunk),
                grid=grid,
                in_specs=common_specs,
                out_specs=tile_spec,
                out_shape=jax.ShapeDtypeStruct((s_pad, E), jnp.float32),
                compiler_params=cparams,
            )(*args)
        else:
            logits = pl.pallas_call(
                functools.partial(encoder_block_head_kernel, seq_len=S,
                                  key_chunk=key_chunk),
                grid=grid,
                in_specs=common_specs + [_const_spec((E, LANE)),
                                         _const_spec((1, LANE))],
                out_specs=pl.BlockSpec((TQ, LANE), lambda i: (i, 0)),
                out_shape=jax.ShapeDtypeStruct((s_pad, LANE), jnp.float32),
                compiler_params=cparams,
            )(*args, prep["fcw"], prep["fcb"])

    # x.mean(dim=1) in PyTorch averages the size-1 batch axis -> identity.
    out = logits[:S, :NUM_CLASSES]
    return out[:, 0] if is_regression else out


# --------------------------- pure-JAX f32 reference -------------------------- #

def reference_forward(x, raw, cat_feats, input_dim, is_regression=True):
    num_feats = [i for i in range(input_dim) if i not in cat_feats]
    minute = x[:, cat_feats[0]].astype(jnp.int32)
    second = x[:, cat_feats[2]].astype(jnp.int32)
    micro = x[:, cat_feats[1]].astype(jnp.int32)
    E, H, D = EMBED_DIM, NUM_HEADS, HEAD_DIM

    def ln(v, w, b):
        mu = v.mean(-1, keepdims=True)
        var = ((v - mu) ** 2).mean(-1, keepdims=True)
        return (v - mu) / jnp.sqrt(var + LN_EPS) * w + b

    h = (x[:, jnp.array(num_feats)] @ raw["embed_w"].T + raw["embed_b"]
         + raw["minute_tbl"][minute] + raw["second_tbl"][second]
         + raw["micro_tbl"][micro])
    for l in range(NUM_LAYERS):
        Wi, bi = raw["in_proj_w"][l], raw["in_proj_b"][l]
        q = h @ Wi[:E].T + bi[:E]
        k = h @ Wi[E:2 * E].T + bi[E:2 * E]
        v = h @ Wi[2 * E:].T + bi[2 * E:]
        qh = jnp.transpose(q.reshape(-1, H, D), (1, 0, 2))
        kh = jnp.transpose(k.reshape(-1, H, D), (1, 0, 2))
        vh = jnp.transpose(v.reshape(-1, H, D), (1, 0, 2))
        s = jnp.einsum('hqd,hkd->hqk', qh, kh) / jnp.sqrt(float(D))
        p = jax.nn.softmax(s, axis=-1)
        av = jnp.transpose(jnp.einsum('hqk,hkd->hqd', p, vh), (1, 0, 2)).reshape(-1, E)
        attn = av @ raw["out_proj_w"][l].T + raw["out_proj_b"][l]
        y = ln(h + attn, raw["ln1_w"][l], raw["ln1_b"][l])
        ff = (jnp.maximum(y @ raw["ff1_w"][l].T + raw["ff1_b"][l], 0.0)
              @ raw["ff2_w"][l].T + raw["ff2_b"][l])
        h = ln(y + ff, raw["ln2_w"][l], raw["ln2_b"][l])
    out = h @ raw["fc_w"].T + raw["fc_b"]
    return out[:, 0] if is_regression else out


if __name__ == "__main__":
    key = jax.random.PRNGKey(0)
    input_dim = 8
    h_m_d_idx = [5, 6, 7]   # forward uses idx[0]=minute, idx[1]=microsecond, idx[2]=second

    k_par, k_small, k_large = jax.random.split(key, 3)
    raw = init_params(k_par, input_dim, len(h_m_d_idx))
    prep = prepare_params(raw)

    def make_batch(k, n):
        k1, k2, k3, k4 = jax.random.split(k, 4)
        xb = jax.random.normal(k1, (n, input_dim), jnp.float32)
        xb = xb.at[:, h_m_d_idx[0]].set(
            jax.random.randint(k2, (n,), 0, 60).astype(jnp.float32))
        xb = xb.at[:, h_m_d_idx[1]].set(
            jax.random.randint(k3, (n,), 0, 1000).astype(jnp.float32))
        xb = xb.at[:, h_m_d_idx[2]].set(
            jax.random.randint(k4, (n,), 0, 60).astype(jnp.float32))
        return xb

    # Small batch -> fully fused single-kernel path.
    x_small = make_batch(k_small, 8)
    y_small = jax.block_until_ready(
        transformer_forward(x_small, prep, h_m_d_idx, input_dim, is_regression=True))
    ref_small = reference_forward(x_small, raw, h_m_d_idx, input_dim)
    assert y_small.shape == (8,)
    assert bool(jnp.all(jnp.isfinite(y_small)))
    assert float(jnp.max(jnp.abs(y_small - ref_small))) < 0.1

    # Larger batch -> tiled path (hoisted QKV + key-chunked online-softmax attention).
    x_large = make_batch(k_large, 200)
    y_large = jax.block_until_ready(
        transformer_forward(x_large, prep, h_m_d_idx, input_dim, is_regression=True,
                            attn_key_chunk=128))
    ref_large = reference_forward(x_large, raw, h_m_d_idx, input_dim)
    assert y_large.shape == (200,)
    assert bool(jnp.all(jnp.isfinite(y_large)))
    assert float(jnp.max(jnp.abs(y_large - ref_large))) < 0.1

    print("KERNEL_OK")
</pallas_src>

<mosaic_0001>
module attributes {stable_mosaic.version = 11 : i64} {
  func.func @fused_model_kernel(%arg0: i32, %arg1: memref<8x8xf32, #tpu.memory_space<vmem>>, %arg2: memref<8x32xf32, #tpu.memory_space<vmem>>, %arg3: memref<8x32xbf16, #tpu.memory_space<vmem>>, %arg4: memref<1x32xf32, #tpu.memory_space<vmem>>, %arg5: memref<2x32x128xbf16, #tpu.memory_space<vmem>>, %arg6: memref<2x1x128xf32, #tpu.memory_space<vmem>>, %arg7: memref<2x4x8x32xbf16, #tpu.memory_space<vmem>>, %arg8: memref<2x32x128xbf16, #tpu.memory_space<vmem>>, %arg9: memref<2x1x128xf32, #tpu.memory_space<vmem>>, %arg10: memref<2x128x32xbf16, #tpu.memory_space<vmem>>, %arg11: memref<2x6x32xf32, #tpu.memory_space<vmem>>, %arg12: memref<32x128xbf16, #tpu.memory_space<vmem>>, %arg13: memref<1x128xf32, #tpu.memory_space<vmem>>, %arg14: memref<8x128xf32, #tpu.memory_space<vmem>>) attributes {dimension_semantics = [#tpu.dimension_semantics<arbitrary>], iteration_bounds = array<i64: 1>, scalar_prefetch = 0 : i64, scratch_operands = 0 : i64, tpu.core_type = #tpu.core_type<tc>, window_params = [{pipeline_mode = #tpu.pipeline_mode<synchronous>, transform_indices = @transform_0, window_bounds = array<i64: 8, 8>}, {pipeline_mode = #tpu.pipeline_mode<synchronous>, transform_indices = @transform_1, window_bounds = array<i64: 8, 32>}, {pipeline_mode = #tpu.pipeline_mode<synchronous>, transform_indices = @transform_2, window_bounds = array<i64: 8, 32>}, {pipeline_mode = #tpu.pipeline_mode<synchronous>, transform_indices = @transform_3, window_bounds = array<i64: 1, 32>}, {pipeline_mode = #tpu.pipeline_mode<synchronous>, transform_indices = @transform_4, window_bounds = array<i64: 2, 32, 128>}, {pipeline_mode = #tpu.pipeline_mode<synchronous>, transform_indices = @transform_5, window_bounds = array<i64: 2, 1, 128>}, {pipeline_mode = #tpu.pipeline_mode<synchronous>, transform_indices = @transform_6, window_bounds = array<i64: 2, 4, 8, 32>}, {pipeline_mode = #tpu.pipeline_mode<synchronous>, transform_indices = @transform_7, window_bounds = array<i64: 2, 32, 128>}, {pipeline_mode = #tpu.pipeline_mode<synchronous>, transform_indices = @transform_8, window_bounds = array<i64: 2, 1, 128>}, {pipeline_mode = #tpu.pipeline_mode<synchronous>, transform_indices = @transform_9, window_bounds = array<i64: 2, 128, 32>}, {pipeline_mode = #tpu.pipeline_mode<synchronous>, transform_indices = @transform_10, window_bounds = array<i64: 2, 6, 32>}, {pipeline_mode = #tpu.pipeline_mode<synchronous>, transform_indices = @transform_11, window_bounds = array<i64: 32, 128>}, {pipeline_mode = #tpu.pipeline_mode<synchronous>, transform_indices = @transform_12, window_bounds = array<i64: 1, 128>}, {pipeline_mode = #tpu.pipeline_mode<synchronous>, transform_indices = @transform_13, window_bounds = array<i64: 8, 128>}]} {
    %c0 = arith.constant 0 : index
    %c0_0 = arith.constant 0 : index
    %0 = vector.load %arg1[%c0, %c0_0] : memref<8x8xf32, #tpu.memory_space<vmem>>, vector<8x8xf32>
    %1 = arith.truncf %0 : vector<8x8xf32> to vector<8x8xbf16>
    %c0_1 = arith.constant 0 : index
    %c0_2 = arith.constant 0 : index
    %2 = vector.load %arg3[%c0_1, %c0_2] : memref<8x32xbf16, #tpu.memory_space<vmem>>, vector<8x32xbf16>
    %cst = arith.constant dense<0.000000e+00> : vector<8x32xf32>
    %3 = tpu.matmul %1, %2, %cst {dimension_numbers = #tpu.dot_dimension_numbers<[1], [0], [0], [1], [0, 0, 1, 1], [], []>} : vector<8x8xbf16>, vector<8x32xbf16>, vector<8x32xf32> -> vector<8x32xf32>
    %c0_3 = arith.constant 0 : index
    %c0_4 = arith.constant 0 : index
    %4 = vector.load %arg4[%c0_3, %c0_4] : memref<1x32xf32, #tpu.memory_space<vmem>>, vector<1x32xf32>
    %5 = vector.broadcast %4 : vector<1x32xf32> to vector<8x32xf32>
    %6 = arith.addf %3, %5 : vector<8x32xf32>
    %c0_5 = arith.constant 0 : index
    %c0_6 = arith.constant 0 : index
    %7 = vector.load %arg2[%c0_5, %c0_6] : memref<8x32xf32, #tpu.memory_space<vmem>>, vector<8x32xf32>
    %8 = arith.addf %6, %7 : vector<8x32xf32>
    %c0_7 = arith.constant 0 : index
    %c0_8 = arith.constant 0 : index
    %c0_9 = arith.constant 0 : index
    %9 = vector.load %arg11[%c0_7, %c0_8, %c0_9] : memref<2x6x32xf32, #tpu.memory_space<vmem>>, vector<1x6x32xf32>
    %10 = vector.shape_cast %9 : vector<1x6x32xf32> to vector<6x32xf32>
    %c0_10 = arith.constant 0 : index
    %c0_11 = arith.constant 0 : index
    %c0_12 = arith.constant 0 : index
    %11 = vector.load %arg5[%c0_10, %c0_11, %c0_12] : memref<2x32x128xbf16, #tpu.memory_space<vmem>>, vector<1x32x128xbf16>
    %12 = vector.shape_cast %11 : vector<1x32x128xbf16> to vector<32x128xbf16>
    %c0_13 = arith.constant 0 : index
    %c0_14 = arith.constant 0 : index
    %c0_15 = arith.constant 0 : index
    %13 = vector.load %arg6[%c0_13, %c0_14, %c0_15] : memref<2x1x128xf32, #tpu.memory_space<vmem>>, vector<1x1x128xf32>
    %14 = vector.shape_cast %13 : vector<1x1x128xf32> to vector<1x128xf32>
    %15 = arith.truncf %8 : vector<8x32xf32> to vector<8x32xbf16>
    %cst_16 = arith.constant dense<0.000000e+00> : vector<8x128xf32>
    %16 = tpu.matmul %15, %12, %cst_16 {dimension_numbers = #tpu.dot_dimension_numbers<[1], [0], [0], [1], [0, 0, 1, 1], [], []>} : vector<8x32xbf16>, vector<32x128xbf16>, vector<8x128xf32> -> vector<8x128xf32>
    %17 = vector.broadcast %14 : vector<1x128xf32> to vector<8x128xf32>
    %18 = arith.addf %16, %17 : vector<8x128xf32>
    %19 = arith.truncf %18 : vector<8x128xf32> to vector<8x128xbf16>
    %20 = vector.extract_strided_slice %19 {offsets = [0, 0], sizes = [8, 8], strides = [1, 1]} : vector<8x128xbf16> to vector<8x8xbf16>
    %21 = vector.extract_strided_slice %19 {offsets = [0, 8], sizes = [8, 8], strides = [1, 1]} : vector<8x128xbf16> to vector<8x8xbf16>
    %22 = vector.extract_strided_slice %19 {offsets = [0, 16], sizes = [8, 8], strides = [1, 1]} : vector<8x128xbf16> to vector<8x8xbf16>
    %23 = vector.extract_strided_slice %19 {offsets = [0, 24], sizes = [8, 8], strides = [1, 1]} : vector<8x128xbf16> to vector<8x8xbf16>
    %24 = vector.shape_cast %20 : vector<8x8xbf16> to vector<1x8x8xbf16>
    %25 = vector.shape_cast %21 : vector<8x8xbf16> to vector<1x8x8xbf16>
    %26 = vector.shape_cast %22 : vector<8x8xbf16> to vector<1x8x8xbf16>
    %27 = vector.shape_cast %23 : vector<8x8xbf16> to vector<1x8x8xbf16>
    %28 = tpu.concatenate %24, %25, %26, %27 in 0 : vector<1x8x8xbf16>, vector<1x8x8xbf16>, vector<1x8x8xbf16>, vector<1x8x8xbf16> -> vector<4x8x8xbf16>
    %29 = vector.extract_strided_slice %19 {offsets = [0, 32], sizes = [8, 8], strides = [1, 1]} : vector<8x128xbf16> to vector<8x8xbf16>
    %30 = vector.extract_strided_slice %19 {offsets = [0, 40], sizes = [8, 8], strides = [1, 1]} : vector<8x128xbf16> to vector<8x8xbf16>
    %31 = vector.extract_strided_slice %19 {offsets = [0, 48], sizes = [8, 8], strides = [1, 1]} : vector<8x128xbf16> to vector<8x8xbf16>
    %32 = vector.extract_strided_slice %19 {offsets = [0, 56], sizes = [8, 8], strides = [1, 1]} : vector<8x128xbf16> to vector<8x8xbf16>
    %33 = vector.shape_cast %29 : vector<8x8xbf16> to vector<1x8x8xbf16>
    %34 = vector.shape_cast %30 : vector<8x8xbf16> to vector<1x8x8xbf16>
    %35 = vector.shape_cast %31 : vector<8x8xbf16> to vector<1x8x8xbf16>
    %36 = vector.shape_cast %32 : vector<8x8xbf16> to vector<1x8x8xbf16>
    %37 = tpu.concatenate %33, %34, %35, %36 in 0 : vector<1x8x8xbf16>, vector<1x8x8xbf16>, vector<1x8x8xbf16>, vector<1x8x8xbf16> -> vector<4x8x8xbf16>
    %38 = vector.extract_strided_slice %19 {offsets = [0, 64], sizes = [8, 8], strides = [1, 1]} : vector<8x128xbf16> to vector<8x8xbf16>
    %39 = vector.extract_strided_slice %19 {offsets = [0, 72], sizes = [8, 8], strides = [1, 1]} : vector<8x128xbf16> to vector<8x8xbf16>
    %40 = vector.extract_strided_slice %19 {offsets = [0, 80], sizes = [8, 8], strides = [1, 1]} : vector<8x128xbf16> to vector<8x8xbf16>
    %41 = vector.extract_strided_slice %19 {offsets = [0, 88], sizes = [8, 8], strides = [1, 1]} : vector<8x128xbf16> to vector<8x8xbf16>
    %42 = vector.shape_cast %38 : vector<8x8xbf16> to vector<1x8x8xbf16>
    %43 = vector.shape_cast %39 : vector<8x8xbf16> to vector<1x8x8xbf16>
    %44 = vector.shape_cast %40 : vector<8x8xbf16> to vector<1x8x8xbf16>
    %45 = vector.shape_cast %41 : vector<8x8xbf16> to vector<1x8x8xbf16>
    %46 = tpu.concatenate %42, %43, %44, %45 in 0 : vector<1x8x8xbf16>, vector<1x8x8xbf16>, vector<1x8x8xbf16>, vector<1x8x8xbf16> -> vector<4x8x8xbf16>
    "tpu.trace_start"() <{level = 10 : i32, message = "hqd,hsd->hqs"}> : () -> ()
    %cst_17 = arith.constant dense<0.000000e+00> : vector<4x8x8xf32>
    %47 = tpu.matmul %28, %37, %cst_17 {dimension_numbers = #tpu.dot_dimension_numbers<[2], [2], [1], [1], [0, 0, 0, 1, 1, 1], [0], [0]>} : vector<4x8x8xbf16>, vector<4x8x8xbf16>, vector<4x8x8xf32> -> vector<4x8x8xf32>
    "tpu.trace_stop"() : () -> ()
    %cst_18 = arith.constant dense<0xFF800000> : vector<4x8xf32>
    %48 = vector.multi_reduction <maximumf>, %47, %cst_18 [2] : vector<4x8x8xf32> to vector<4x8xf32>
    %49 = vector.shape_cast %48 : vector<4x8xf32> to vector<4x8x1xf32>
    %50 = vector.broadcast %49 : vector<4x8x1xf32> to vector<4x8x8xf32>
    %51 = arith.subf %47, %50 : vector<4x8x8xf32>
    %52 = math.exp %51 : vector<4x8x8xf32>
    %cst_19 = arith.constant dense<0.000000e+00> : vector<4x8xf32>
    %53 = vector.multi_reduction <add>, %52, %cst_19 [2] : vector<4x8x8xf32> to vector<4x8xf32>
    %54 = vector.shape_cast %53 : vector<4x8xf32> to vector<4x8x1xf32>
    %55 = tpu.reciprocal %54 {approx = true} : vector<4x8x1xf32> -> vector<4x8x1xf32>
    %56 = vector.broadcast %55 : vector<4x8x1xf32> to vector<4x8x8xf32>
    %57 = arith.mulf %52, %56 : vector<4x8x8xf32>
    %58 = arith.truncf %57 : vector<4x8x8xf32> to vector<4x8x8xbf16>
    "tpu.trace_start"() <{level = 10 : i32, message = "hqs,hsd->hqd"}> : () -> ()
    %cst_20 = arith.constant dense<0.000000e+00> : vector<4x8x8xf32>
    %59 = tpu.matmul %58, %46, %cst_20 {dimension_numbers = #tpu.dot_dimension_numbers<[2], [1], [1], [2], [0, 0, 0, 1, 1, 2], [0], [0]>} : vector<4x8x8xbf16>, vector<4x8x8xbf16>, vector<4x8x8xf32> -> vector<4x8x8xf32>
    "tpu.trace_stop"() : () -> ()
    %c0_21 = arith.constant 0 : index
    %c0_22 = arith.constant 0 : index
    %c0_23 = arith.constant 0 : index
    %c0_24 = arith.constant 0 : index
    %60 = vector.load %arg7[%c0_21, %c0_22, %c0_23, %c0_24] : memref<2x4x8x32xbf16, #tpu.memory_space<vmem>>, vector<1x4x8x32xbf16>
    %61 = vector.shape_cast %60 : vector<1x4x8x32xbf16> to vector<4x8x32xbf16>
    %c0_25 = arith.constant 0 : index
    %c0_26 = arith.constant 0 : index
    %c0_27 = arith.constant 0 : index
    %62 = vector.load %arg8[%c0_25, %c0_26, %c0_27] : memref<2x32x128xbf16, #tpu.memory_space<vmem>>, vector<1x32x128xbf16>
    %63 = vector.shape_cast %62 : vector<1x32x128xbf16> to vector<32x128xbf16>
    %c0_28 = arith.constant 0 : index
    %c0_29 = arith.constant 0 : index
    %c0_30 = arith.constant 0 : index
    %64 = vector.load %arg9[%c0_28, %c0_29, %c0_30] : memref<2x1x128xf32, #tpu.memory_space<vmem>>, vector<1x1x128xf32>
    %65 = vector.shape_cast %64 : vector<1x1x128xf32> to vector<1x128xf32>
    %c0_31 = arith.constant 0 : index
    %c0_32 = arith.constant 0 : index
    %c0_33 = arith.constant 0 : index
    %66 = vector.load %arg10[%c0_31, %c0_32, %c0_33] : memref<2x128x32xbf16, #tpu.memory_space<vmem>>, vector<1x128x32xbf16>
    %67 = vector.shape_cast %66 : vector<1x128x32xbf16> to vector<128x32xbf16>
    %68 = arith.truncf %59 : vector<4x8x8xf32> to vector<4x8x8xbf16>
    "tpu.trace_start"() <{level = 10 : i32, message = "hqd,hde->hqe"}> : () -> ()
    %cst_34 = arith.constant dense<0.000000e+00> : vector<4x8x32xf32>
    %69 = tpu.matmul %68, %61, %cst_34 {dimension_numbers = #tpu.dot_dimension_numbers<[2], [1], [1], [2], [0, 0, 0, 1, 1, 2], [0], [0]>} : vector<4x8x8xbf16>, vector<4x8x32xbf16>, vector<4x8x32xf32> -> vector<4x8x32xf32>
    "tpu.trace_stop"() : () -> ()
    %cst_35 = arith.constant dense<0.000000e+00> : vector<8x32xf32>
    %70 = vector.multi_reduction <add>, %69, %cst_35 [0] : vector<4x8x32xf32> to vector<8x32xf32>
    %71 = vector.extract_strided_slice %10 {offsets = [0, 0], sizes = [1, 32], strides = [1, 1]} : vector<6x32xf32> to vector<1x32xf32>
    %72 = vector.broadcast %71 : vector<1x32xf32> to vector<8x32xf32>
    %73 = arith.addf %70, %72 : vector<8x32xf32>
    %74 = arith.addf %8, %73 : vector<8x32xf32>
    %75 = vector.extract_strided_slice %10 {offsets = [1, 0], sizes = [1, 32], strides = [1, 1]} : vector<6x32xf32> to vector<1x32xf32>
    %76 = vector.extract_strided_slice %10 {offsets = [2, 0], sizes = [1, 32], strides = [1, 1]} : vector<6x32xf32> to vector<1x32xf32>
    %cst_36 = arith.constant dense<0.000000e+00> : vector<8xf32>
    %77 = vector.multi_reduction <add>, %74, %cst_36 [1] : vector<8x32xf32> to vector<8xf32>
    %78 = vector.shape_cast %77 : vector<8xf32> to vector<8x1xf32>
    %cst_37 = arith.constant 3.200000e+01 : f32
    %79 = vector.broadcast %cst_37 : f32 to vector<8x1xf32>
    %80 = arith.divf %78, %79 : vector<8x1xf32>
    %81 = vector.broadcast %80 : vector<8x1xf32> to vector<8x32xf32>
    %82 = arith.subf %74, %81 : vector<8x32xf32>
    %83 = arith.mulf %82, %82 : vector<8x32xf32>
    %cst_38 = arith.constant dense<0.000000e+00> : vector<8xf32>
    %84 = vector.multi_reduction <add>, %83, %cst_38 [1] : vector<8x32xf32> to vector<8xf32>
    %85 = vector.shape_cast %84 : vector<8xf32> to vector<8x1xf32>
    %cst_39 = arith.constant 3.200000e+01 : f32
    %86 = vector.broadcast %cst_39 : f32 to vector<8x1xf32>
    %87 = arith.divf %85, %86 : vector<8x1xf32>
    %88 = vector.broadcast %80 : vector<8x1xf32> to vector<8x32xf32>
    %89 = arith.subf %74, %88 : vector<8x32xf32>
    %cst_40 = arith.constant 9.99999974E-6 : f32
    %90 = vector.broadcast %cst_40 : f32 to vector<8x1xf32>
    %91 = arith.addf %87, %90 : vector<8x1xf32>
    %92 = math.rsqrt %91 : vector<8x1xf32>
    %93 = vector.broadcast %92 : vector<8x1xf32> to vector<8x32xf32>
    %94 = arith.mulf %89, %93 : vector<8x32xf32>
    %95 = vector.broadcast %75 : vector<1x32xf32> to vector<8x32xf32>
    %96 = arith.mulf %94, %95 : vector<8x32xf32>
    %97 = vector.broadcast %76 : vector<1x32xf32> to vector<8x32xf32>
    %98 = arith.addf %96, %97 : vector<8x32xf32>
    %99 = arith.truncf %98 : vector<8x32xf32> to vector<8x32xbf16>
    %cst_41 = arith.constant dense<0.000000e+00> : vector<8x128xf32>
    %100 = tpu.matmul %99, %63, %cst_41 {dimension_numbers = #tpu.dot_dimension_numbers<[1], [0], [0], [1], [0, 0, 1, 1], [], []>} : vector<8x32xbf16>, vector<32x128xbf16>, vector<8x128xf32> -> vector<8x128xf32>
    %101 = vector.broadcast %65 : vector<1x128xf32> to vector<8x128xf32>
    %102 = arith.addf %100, %101 : vector<8x128xf32>
    %cst_42 = arith.constant 0.000000e+00 : f32
    %103 = vector.broadcast %cst_42 : f32 to vector<8x128xf32>
    %104 = arith.maximumf %102, %103 : vector<8x128xf32>
    %105 = arith.truncf %104 : vector<8x128xf32> to vector<8x128xbf16>
    %cst_43 = arith.constant dense<0.000000e+00> : vector<8x32xf32>
    %106 = tpu.matmul %105, %67, %cst_43 {dimension_numbers = #tpu.dot_dimension_numbers<[1], [0], [0], [1], [0, 0, 1, 1], [], []>} : vector<8x128xbf16>, vector<128x32xbf16>, vector<8x32xf32> -> vector<8x32xf32>
    %107 = vector.extract_strided_slice %10 {offsets = [5, 0], sizes = [1, 32], strides = [1, 1]} : vector<6x32xf32> to vector<1x32xf32>
    %108 = vector.broadcast %107 : vector<1x32xf32> to vector<8x32xf32>
    %109 = arith.addf %106, %108 : vector<8x32xf32>
    %110 = arith.addf %98, %109 : vector<8x32xf32>
    %111 = vector.extract_strided_slice %10 {offsets = [3, 0], sizes = [1, 32], strides = [1, 1]} : vector<6x32xf32> to vector<1x32xf32>
    %112 = vector.extract_strided_slice %10 {offsets = [4, 0], sizes = [1, 32], strides = [1, 1]} : vector<6x32xf32> to vector<1x32xf32>
    %cst_44 = arith.constant dense<0.000000e+00> : vector<8xf32>
    %113 = vector.multi_reduction <add>, %110, %cst_44 [1] : vector<8x32xf32> to vector<8xf32>
    %114 = vector.shape_cast %113 : vector<8xf32> to vector<8x1xf32>
    %cst_45 = arith.constant 3.200000e+01 : f32
    %115 = vector.broadcast %cst_45 : f32 to vector<8x1xf32>
    %116 = arith.divf %114, %115 : vector<8x1xf32>
    %117 = vector.broadcast %116 : vector<8x1xf32> to vector<8x32xf32>
    %118 = arith.subf %110, %117 : vector<8x32xf32>
    %119 = arith.mulf %118, %118 : vector<8x32xf32>
    %cst_46 = arith.constant dense<0.000000e+00> : vector<8xf32>
    %120 = vector.multi_reduction <add>, %119, %cst_46 [1] : vector<8x32xf32> to vector<8xf32>
    %121 = vector.shape_cast %120 : vector<8xf32> to vector<8x1xf32>
    %cst_47 = arith.constant 3.200000e+01 : f32
    %122 = vector.broadcast %cst_47 : f32 to vector<8x1xf32>
    %123 = arith.divf %121, %122 : vector<8x1xf32>
    %124 = vector.broadcast %116 : vector<8x1xf32> to vector<8x32xf32>
    %125 = arith.subf %110, %124 : vector<8x32xf32>
    %cst_48 = arith.constant 9.99999974E-6 : f32
    %126 = vector.broadcast %cst_48 : f32 to vector<8x1xf32>
    %127 = arith.addf %123, %126 : vector<8x1xf32>
    %128 = math.rsqrt %127 : vector<8x1xf32>
    %129 = vector.broadcast %128 : vector<8x1xf32> to vector<8x32xf32>
    %130 = arith.mulf %125, %129 : vector<8x32xf32>
    %131 = vector.broadcast %111 : vector<1x32xf32> to vector<8x32xf32>
    %132 = arith.mulf %130, %131 : vector<8x32xf32>
    %133 = vector.broadcast %112 : vector<1x32xf32> to vector<8x32xf32>
    %134 = arith.addf %132, %133 : vector<8x32xf32>
    %c1 = arith.constant 1 : index
    %c0_49 = arith.constant 0 : index
    %c0_50 = arith.constant 0 : index
    %135 = vector.load %arg11[%c1, %c0_49, %c0_50] : memref<2x6x32xf32, #tpu.memory_space<vmem>>, vector<1x6x32xf32>
    %136 = vector.shape_cast %135 : vector<1x6x32xf32> to vector<6x32xf32>
    %c1_51 = arith.constant 1 : index
    %c0_52 = arith.constant 0 : index
    %c0_53 = arith.constant 0 : index
    %137 = vector.load %arg5[%c1_51, %c0_52, %c0_53] : memref<2x32x128xbf16, #tpu.memory_space<vmem>>, vector<1x32x128xbf16>
    %138 = vector.shape_cast %137 : vector<1x32x128xbf16> to vector<32x128xbf16>
    %c1_54 = arith.constant 1 : index
    %c0_55 = arith.constant 0 : index
    %c0_56 = arith.constant 0 : index
    %139 = vector.load %arg6[%c1_54, %c0_55, %c0_56] : memref<2x1x128xf32, #tpu.memory_space<vmem>>, vector<1x1x128xf32>
    %140 = vector.shape_cast %139 : vector<1x1x128xf32> to vector<1x128xf32>
    %141 = arith.truncf %134 : vector<8x32xf32> to vector<8x32xbf16>
    %cst_57 = arith.constant dense<0.000000e+00> : vector<8x128xf32>
    %142 = tpu.matmul %141, %138, %cst_57 {dimension_numbers = #tpu.dot_dimension_numbers<[1], [0], [0], [1], [0, 0, 1, 1], [], []>} : vector<8x32xbf16>, vector<32x128xbf16>, vector<8x128xf32> -> vector<8x128xf32>
    %143 = vector.broadcast %140 : vector<1x128xf32> to vector<8x128xf32>
    %144 = arith.addf %142, %143 : vector<8x128xf32>
    %145 = arith.truncf %144 : vector<8x128xf32> to vector<8x128xbf16>
    %146 = vector.extract_strided_slice %145 {offsets = [0, 0], sizes = [8, 8], strides = [1, 1]} : vector<8x128xbf16> to vector<8x8xbf16>
    %147 = vector.extract_strided_slice %145 {offsets = [0, 8], sizes = [8, 8], strides = [1, 1]} : vector<8x128xbf16> to vector<8x8xbf16>
    %148 = vector.extract_strided_slice %145 {offsets = [0, 16], sizes = [8, 8], strides = [1, 1]} : vector<8x128xbf16> to vector<8x8xbf16>
    %149 = vector.extract_strided_slice %145 {offsets = [0, 24], sizes = [8, 8], strides = [1, 1]} : vector<8x128xbf16> to vector<8x8xbf16>
    %150 = vector.shape_cast %146 : vector<8x8xbf16> to vector<1x8x8xbf16>
    %151 = vector.shape_cast %147 : vector<8x8xbf16> to vector<1x8x8xbf16>
    %152 = vector.shape_cast %148 : vector<8x8xbf16> to vector<1x8x8xbf16>
    %153 = vector.shape_cast %149 : vector<8x8xbf16> to vector<1x8x8xbf16>
    %154 = tpu.concatenate %150, %151, %152, %153 in 0 : vector<1x8x8xbf16>, vector<1x8x8xbf16>, vector<1x8x8xbf16>, vector<1x8x8xbf16> -> vector<4x8x8xbf16>
    %155 = vector.extract_strided_slice %145 {offsets = [0, 32], sizes = [8, 8], strides = [1, 1]} : vector<8x128xbf16> to vector<8x8xbf16>
    %156 = vector.extract_strided_slice %145 {offsets = [0, 40], sizes = [8, 8], strides = [1, 1]} : vector<8x128xbf16> to vector<8x8xbf16>
    %157 = vector.extract_strided_slice %145 {offsets = [0, 48], sizes = [8, 8], strides = [1, 1]} : vector<8x128xbf16> to vector<8x8xbf16>
    %158 = vector.extract_strided_slice %145 {offsets = [0, 56], sizes = [8, 8], strides = [1, 1]} : vector<8x128xbf16> to vector<8x8xbf16>
    %159 = vector.shape_cast %155 : vector<8x8xbf16> to vector<1x8x8xbf16>
    %160 = vector.shape_cast %156 : vector<8x8xbf16> to vector<1x8x8xbf16>
    %161 = vector.shape_cast %157 : vector<8x8xbf16> to vector<1x8x8xbf16>
    %162 = vector.shape_cast %158 : vector<8x8xbf16> to vector<1x8x8xbf16>
    %163 = tpu.concatenate %159, %160, %161, %162 in 0 : vector<1x8x8xbf16>, vector<1x8x8xbf16>, vector<1x8x8xbf16>, vector<1x8x8xbf16> -> vector<4x8x8xbf16>
    %164 = vector.extract_strided_slice %145 {offsets = [0, 64], sizes = [8, 8], strides = [1, 1]} : vector<8x128xbf16> to vector<8x8xbf16>
    %165 = vector.extract_strided_slice %145 {offsets = [0, 72], sizes = [8, 8], strides = [1, 1]} : vector<8x128xbf16> to vector<8x8xbf16>
    %166 = vector.extract_strided_slice %145 {offsets = [0, 80], sizes = [8, 8], strides = [1, 1]} : vector<8x128xbf16> to vector<8x8xbf16>
    %167 = vector.extract_strided_slice %145 {offsets = [0, 88], sizes = [8, 8], strides = [1, 1]} : vector<8x128xbf16> to vector<8x8xbf16>
    %168 = vector.shape_cast %164 : vector<8x8xbf16> to vector<1x8x8xbf16>
    %169 = vector.shape_cast %165 : vector<8x8xbf16> to vector<1x8x8xbf16>
    %170 = vector.shape_cast %166 : vector<8x8xbf16> to vector<1x8x8xbf16>
    %171 = vector.shape_cast %167 : vector<8x8xbf16> to vector<1x8x8xbf16>
    %172 = tpu.concatenate %168, %169, %170, %171 in 0 : vector<1x8x8xbf16>, vector<1x8x8xbf16>, vector<1x8x8xbf16>, vector<1x8x8xbf16> -> vector<4x8x8xbf16>
    "tpu.trace_start"() <{level = 10 : i32, message = "hqd,hsd->hqs"}> : () -> ()
    %cst_58 = arith.constant dense<0.000000e+00> : vector<4x8x8xf32>
    %173 = tpu.matmul %154, %163, %cst_58 {dimension_numbers = #tpu.dot_dimension_numbers<[2], [2], [1], [1], [0, 0, 0, 1, 1, 1], [0], [0]>} : vector<4x8x8xbf16>, vector<4x8x8xbf16>, vector<4x8x8xf32> -> vector<4x8x8xf32>
    "tpu.trace_stop"() : () -> ()
    %cst_59 = arith.constant dense<0xFF800000> : vector<4x8xf32>
    %174 = vector.multi_reduction <maximumf>, %173, %cst_59 [2] : vector<4x8x8xf32> to vector<4x8xf32>
    %175 = vector.shape_cast %174 : vector<4x8xf32> to vector<4x8x1xf32>
    %176 = vector.broadcast %175 : vector<4x8x1xf32> to vector<4x8x8xf32>
    %177 = arith.subf %173, %176 : vector<4x8x8xf32>
    %178 = math.exp %177 : vector<4x8x8xf32>
    %cst_60 = arith.constant dense<0.000000e+00> : vector<4x8xf32>
    %179 = vector.multi_reduction <add>, %178, %cst_60 [2] : vector<4x8x8xf32> to vector<4x8xf32>
    %180 = vector.shape_cast %179 : vector<4x8xf32> to vector<4x8x1xf32>
    %181 = tpu.reciprocal %180 {approx = true} : vector<4x8x1xf32> -> vector<4x8x1xf32>
    %182 = vector.broadcast %181 : vector<4x8x1xf32> to vector<4x8x8xf32>
    %183 = arith.mulf %178, %182 : vector<4x8x8xf32>
    %184 = arith.truncf %183 : vector<4x8x8xf32> to vector<4x8x8xbf16>
    "tpu.trace_start"() <{level = 10 : i32, message = "hqs,hsd->hqd"}> : () -> ()
    %cst_61 = arith.constant dense<0.000000e+00> : vector<4x8x8xf32>
    %185 = tpu.matmul %184, %172, %cst_61 {dimension_numbers = #tpu.dot_dimension_numbers<[2], [1], [1], [2], [0, 0, 0, 1, 1, 2], [0], [0]>} : vector<4x8x8xbf16>, vector<4x8x8xbf16>, vector<4x8x8xf32> -> vector<4x8x8xf32>
    "tpu.trace_stop"() : () -> ()
    %c1_62 = arith.constant 1 : index
    %c0_63 = arith.constant 0 : index
    %c0_64 = arith.constant 0 : index
    %c0_65 = arith.constant 0 : index
    %186 = vector.load %arg7[%c1_62, %c0_63, %c0_64, %c0_65] : memref<2x4x8x32xbf16, #tpu.memory_space<vmem>>, vector<1x4x8x32xbf16>
    %187 = vector.shape_cast %186 : vector<1x4x8x32xbf16> to vector<4x8x32xbf16>
    %c1_66 = arith.constant 1 : index
    %c0_67 = arith.constant 0 : index
    %c0_68 = arith.constant 0 : index
    %188 = vector.load %arg8[%c1_66, %c0_67, %c0_68] : memref<2x32x128xbf16, #tpu.memory_space<vmem>>, vector<1x32x128xbf16>
    %189 = vector.shape_cast %188 : vector<1x32x128xbf16> to vector<32x128xbf16>
    %c1_69 = arith.constant 1 : index
    %c0_70 = arith.constant 0 : index
    %c0_71 = arith.constant 0 : index
    %190 = vector.load %arg9[%c1_69, %c0_70, %c0_71] : memref<2x1x128xf32, #tpu.memory_space<vmem>>, vector<1x1x128xf32>
    %191 = vector.shape_cast %190 : vector<1x1x128xf32> to vector<1x128xf32>
    %c1_72 = arith.constant 1 : index
    %c0_73 = arith.constant 0 : index
    %c0_74 = arith.constant 0 : index
    %192 = vector.load %arg10[%c1_72, %c0_73, %c0_74] : memref<2x128x32xbf16, #tpu.memory_space<vmem>>, vector<1x128x32xbf16>
    %193 = vector.shape_cast %192 : vector<1x128x32xbf16> to vector<128x32xbf16>
    %194 = arith.truncf %185 : vector<4x8x8xf32> to vector<4x8x8xbf16>
    "tpu.trace_start"() <{level = 10 : i32, message = "hqd,hde->hqe"}> : () -> ()
    %cst_75 = arith.constant dense<0.000000e+00> : vector<4x8x32xf32>
    %195 = tpu.matmul %194, %187, %cst_75 {dimension_numbers = #tpu.dot_dimension_numbers<[2], [1], [1], [2], [0, 0, 0, 1, 1, 2], [0], [0]>} : vector<4x8x8xbf16>, vector<4x8x32xbf16>, vector<4x8x32xf32> -> vector<4x8x32xf32>
    "tpu.trace_stop"() : () -> ()
    %cst_76 = arith.constant dense<0.000000e+00> : vector<8x32xf32>
    %196 = vector.multi_reduction <add>, %195, %cst_76 [0] : vector<4x8x32xf32> to vector<8x32xf32>
    %197 = vector.extract_strided_slice %136 {offsets = [0, 0], sizes = [1, 32], strides = [1, 1]} : vector<6x32xf32> to vector<1x32xf32>
    %198 = vector.broadcast %197 : vector<1x32xf32> to vector<8x32xf32>
    %199 = arith.addf %196, %198 : vector<8x32xf32>
    %200 = arith.addf %134, %199 : vector<8x32xf32>
    %201 = vector.extract_strided_slice %136 {offsets = [1, 0], sizes = [1, 32], strides = [1, 1]} : vector<6x32xf32> to vector<1x32xf32>
    %202 = vector.extract_strided_slice %136 {offsets = [2, 0], sizes = [1, 32], strides = [1, 1]} : vector<6x32xf32> to vector<1x32xf32>
    %cst_77 = arith.constant dense<0.000000e+00> : vector<8xf32>
    %203 = vector.multi_reduction <add>, %200, %cst_77 [1] : vector<8x32xf32> to vector<8xf32>
    %204 = vector.shape_cast %203 : vector<8xf32> to vector<8x1xf32>
    %cst_78 = arith.constant 3.200000e+01 : f32
    %205 = vector.broadcast %cst_78 : f32 to vector<8x1xf32>
    %206 = arith.divf %204, %205 : vector<8x1xf32>
    %207 = vector.broadcast %206 : vector<8x1xf32> to vector<8x32xf32>
    %208 = arith.subf %200, %207 : vector<8x32xf32>
    %209 = arith.mulf %208, %208 : vector<8x32xf32>
    %cst_79 = arith.constant dense<0.000000e+00> : vector<8xf32>
    %210 = vector.multi_reduction <add>, %209, %cst_79 [1] : vector<8x32xf32> to vector<8xf32>
    %211 = vector.shape_cast %210 : vector<8xf32> to vector<8x1xf32>
    %cst_80 = arith.constant 3.200000e+01 : f32
    %212 = vector.broadcast %cst_80 : f32 to vector<8x1xf32>
    %213 = arith.divf %211, %212 : vector<8x1xf32>
    %214 = vector.broadcast %206 : vector<8x1xf32> to vector<8x32xf32>
    %215 = arith.subf %200, %214 : vector<8x32xf32>
    %cst_81 = arith.constant 9.99999974E-6 : f32
    %216 = vector.broadcast %cst_81 : f32 to vector<8x1xf32>
    %217 = arith.addf %213, %216 : vector<8x1xf32>
    %218 = math.rsqrt %217 : vector<8x1xf32>
    %219 = vector.broadcast %218 : vector<8x1xf32> to vector<8x32xf32>
    %220 = arith.mulf %215, %219 : vector<8x32xf32>
    %221 = vector.broadcast %201 : vector<1x32xf32> to vector<8x32xf32>
    %222 = arith.mulf %220, %221 : vector<8x32xf32>
    %223 = vector.broadcast %202 : vector<1x32xf32> to vector<8x32xf32>
    %224 = arith.addf %222, %223 : vector<8x32xf32>
    %225 = arith.truncf %224 : vector<8x32xf32> to vector<8x32xbf16>
    %cst_82 = arith.constant dense<0.000000e+00> : vector<8x128xf32>
    %226 = tpu.matmul %225, %189, %cst_82 {dimension_numbers = #tpu.dot_dimension_numbers<[1], [0], [0], [1], [0, 0, 1, 1], [], []>} : vector<8x32xbf16>, vector<32x128xbf16>, vector<8x128xf32> -> vector<8x128xf32>
    %227 = vector.broadcast %191 : vector<1x128xf32> to vector<8x128xf32>
    %228 = arith.addf %226, %227 : vector<8x128xf32>
    %cst_83 = arith.constant 0.000000e+00 : f32
    %229 = vector.broadcast %cst_83 : f32 to vector<8x128xf32>
    %230 = arith.maximumf %228, %229 : vector<8x128xf32>
    %231 = arith.truncf %230 : vector<8x128xf32> to vector<8x128xbf16>
    %cst_84 = arith.constant dense<0.000000e+00> : vector<8x32xf32>
    %232 = tpu.matmul %231, %193, %cst_84 {dimension_numbers = #tpu.dot_dimension_numbers<[1], [0], [0], [1], [0, 0, 1, 1], [], []>} : vector<8x128xbf16>, vector<128x32xbf16>, vector<8x32xf32> -> vector<8x32xf32>
    %233 = vector.extract_strided_slice %136 {offsets = [5, 0], sizes = [1, 32], strides = [1, 1]} : vector<6x32xf32> to vector<1x32xf32>
    %234 = vector.broadcast %233 : vector<1x32xf32> to vector<8x32xf32>
    %235 = arith.addf %232, %234 : vector<8x32xf32>
    %236 = arith.addf %224, %235 : vector<8x32xf32>
    %237 = vector.extract_strided_slice %136 {offsets = [3, 0], sizes = [1, 32], strides = [1, 1]} : vector<6x32xf32> to vector<1x32xf32>
    %238 = vector.extract_strided_slice %136 {offsets = [4, 0], sizes = [1, 32], strides = [1, 1]} : vector<6x32xf32> to vector<1x32xf32>
    %cst_85 = arith.constant dense<0.000000e+00> : vector<8xf32>
    %239 = vector.multi_reduction <add>, %236, %cst_85 [1] : vector<8x32xf32> to vector<8xf32>
    %240 = vector.shape_cast %239 : vector<8xf32> to vector<8x1xf32>
    %cst_86 = arith.constant 3.200000e+01 : f32
    %241 = vector.broadcast %cst_86 : f32 to vector<8x1xf32>
    %242 = arith.divf %240, %241 : vector<8x1xf32>
    %243 = vector.broadcast %242 : vector<8x1xf32> to vector<8x32xf32>
    %244 = arith.subf %236, %243 : vector<8x32xf32>
    %245 = arith.mulf %244, %244 : vector<8x32xf32>
    %cst_87 = arith.constant dense<0.000000e+00> : vector<8xf32>
    %246 = vector.multi_reduction <add>, %245, %cst_87 [1] : vector<8x32xf32> to vector<8xf32>
    %247 = vector.shape_cast %246 : vector<8xf32> to vector<8x1xf32>
    %cst_88 = arith.constant 3.200000e+01 : f32
    %248 = vector.broadcast %cst_88 : f32 to vector<8x1xf32>
    %249 = arith.divf %247, %248 : vector<8x1xf32>
    %250 = vector.broadcast %242 : vector<8x1xf32> to vector<8x32xf32>
    %251 = arith.subf %236, %250 : vector<8x32xf32>
    %cst_89 = arith.constant 9.99999974E-6 : f32
    %252 = vector.broadcast %cst_89 : f32 to vector<8x1xf32>
    %253 = arith.addf %249, %252 : vector<8x1xf32>
    %254 = math.rsqrt %253 : vector<8x1xf32>
    %255 = vector.broadcast %254 : vector<8x1xf32> to vector<8x32xf32>
    %256 = arith.mulf %251, %255 : vector<8x32xf32>
    %257 = vector.broadcast %237 : vector<1x32xf32> to vector<8x32xf32>
    %258 = arith.mulf %256, %257 : vector<8x32xf32>
    %259 = vector.broadcast %238 : vector<1x32xf32> to vector<8x32xf32>
    %260 = arith.addf %258, %259 : vector<8x32xf32>
    %261 = arith.truncf %260 : vector<8x32xf32> to vector<8x32xbf16>
    %c0_90 = arith.constant 0 : index
    %c0_91 = arith.constant 0 : index
    %262 = vector.load %arg12[%c0_90, %c0_91] : memref<32x128xbf16, #tpu.memory_space<vmem>>, vector<32x128xbf16>
    %cst_92 = arith.constant dense<0.000000e+00> : vector<8x128xf32>
    %263 = tpu.matmul %261, %262, %cst_92 {dimension_numbers = #tpu.dot_dimension_numbers<[1], [0], [0], [1], [0, 0, 1, 1], [], []>} : vector<8x32xbf16>, vector<32x128xbf16>, vector<8x128xf32> -> vector<8x128xf32>
    %c0_93 = arith.constant 0 : index
    %c0_94 = arith.constant 0 : index
    %264 = vector.load %arg13[%c0_93, %c0_94] : memref<1x128xf32, #tpu.memory_space<vmem>>, vector<1x128xf32>
    %265 = vector.broadcast %264 : vector<1x128xf32> to vector<8x128xf32>
    %266 = arith.addf %263, %265 : vector<8x128xf32>
    %c0_95 = arith.constant 0 : index
    %c0_96 = arith.constant 0 : index
    %267 = vector.load %arg14[%c0_95, %c0_96] : memref<8x128xf32, #tpu.memory_space<vmem>>, vector<8x128xf32>
    tpu.vector_store %arg14[%c0_95, %c0_96], %266 {strides = array<i32>} : memref<8x128xf32, #tpu.memory_space<vmem>>, vector<8x128xf32>,
    return
  }
  func.func @transform_0(%arg0: i32) -> (i32, i32) {
    %c0_i32 = arith.constant 0 : i32
    %c0_i32_0 = arith.constant 0 : i32
    %c0_i32_1 = arith.constant 0 : i32
    return %c0_i32, %c0_i32_0 : i32, i32
  }
  func.func @transform_1(%arg0: i32) -> (i32, i32) {
    %c0_i32 = arith.constant 0 : i32
    %c0_i32_0 = arith.constant 0 : i32
    %c0_i32_1 = arith.constant 0 : i32
    return %c0_i32, %c0_i32_0 : i32, i32
  }
  func.func @transform_2(%arg0: i32) -> (i32, i32) {
    %c0_i32 = arith.constant 0 : i32
    %c0_i32_0 = arith.constant 0 : i32
    %c0_i32_1 = arith.constant 0 : i32
    return %c0_i32, %c0_i32_0 : i32, i32
  }
  func.func @transform_3(%arg0: i32) -> (i32, i32) {
    %c0_i32 = arith.constant 0 : i32
    %c0_i32_0 = arith.constant 0 : i32
    %c0_i32_1 = arith.constant 0 : i32
    return %c0_i32, %c0_i32_0 : i32, i32
  }
  func.func @transform_4(%arg0: i32) -> (i32, i32, i32) {
    %c0_i32 = arith.constant 0 : i32
    %c0_i32_0 = arith.constant 0 : i32
    %c0_i32_1 = arith.constant 0 : i32
    %c0_i32_2 = arith.constant 0 : i32
    return %c0_i32, %c0_i32_0, %c0_i32_1 : i32, i32, i32
  }
  func.func @transform_5(%arg0: i32) -> (i32, i32, i32) {
    %c0_i32 = arith.constant 0 : i32
    %c0_i32_0 = arith.constant 0 : i32
    %c0_i32_1 = arith.constant 0 : i32
    %c0_i32_2 = arith.constant 0 : i32
    return %c0_i32, %c0_i32_0, %c0_i32_1 : i32, i32, i32
  }
  func.func @transform_6(%arg0: i32) -> (i32, i32, i32, i32) {
    %c0_i32 = arith.constant 0 : i32
    %c0_i32_0 = arith.constant 0 : i32
    %c0_i32_1 = arith.constant 0 : i32
    %c0_i32_2 = arith.constant 0 : i32
    %c0_i32_3 = arith.constant 0 : i32
    return %c0_i32, %c0_i32_0, %c0_i32_1, %c0_i32_2 : i32, i32, i32, i32
  }
  func.func @transform_7(%arg0: i32) -> (i32, i32, i32) {
    %c0_i32 = arith.constant 0 : i32
    %c0_i32_0 = arith.constant 0 : i32
    %c0_i32_1 = arith.constant 0 : i32
    %c0_i32_2 = arith.constant 0 : i32
    return %c0_i32, %c0_i32_0, %c0_i32_1 : i32, i32, i32
  }
  func.func @transform_8(%arg0: i32) -> (i32, i32, i32) {
    %c0_i32 = arith.constant 0 : i32
    %c0_i32_0 = arith.constant 0 : i32
    %c0_i32_1 = arith.constant 0 : i32
    %c0_i32_2 = arith.constant 0 : i32
    return %c0_i32, %c0_i32_0, %c0_i32_1 : i32, i32, i32
  }
  func.func @transform_9(%arg0: i32) -> (i32, i32, i32) {
    %c0_i32 = arith.constant 0 : i32
    %c0_i32_0 = arith.constant 0 : i32
    %c0_i32_1 = arith.constant 0 : i32
    %c0_i32_2 = arith.constant 0 : i32
    return %c0_i32, %c0_i32_0, %c0_i32_1 : i32, i32, i32
  }
  func.func @transform_10(%arg0: i32) -> (i32, i32, i32) {
    %c0_i32 = arith.constant 0 : i32
    %c0_i32_0 = arith.constant 0 : i32
    %c0_i32_1 = arith.constant 0 : i32
    %c0_i32_2 = arith.constant 0 : i32
    return %c0_i32, %c0_i32_0, %c0_i32_1 : i32, i32, i32
  }
  func.func @transform_11(%arg0: i32) -> (i32, i32) {
    %c0_i32 = arith.constant 0 : i32
    %c0_i32_0 = arith.constant 0 : i32
    %c0_i32_1 = arith.constant 0 : i32
    return %c0_i32, %c0_i32_0 : i32, i32
  }
  func.func @transform_12(%arg0: i32) -> (i32, i32) {
    %c0_i32 = arith.constant 0 : i32
    %c0_i32_0 = arith.constant 0 : i32
    %c0_i32_1 = arith.constant 0 : i32
    return %c0_i32, %c0_i32_0 : i32, i32
  }
  func.func @transform_13(%arg0: i32) -> (i32, i32) {
    %c0_i32 = arith.constant 0 : i32
    %c0_i32_0 = arith.constant 0 : i32
    %c0_i32_1 = arith.constant 0 : i32
    return %c0_i32, %c0_i32_0 : i32, i32
  }
}

</mosaic_0001>

<llo_original>
// kernel: tpu_custom_call.1
$region0: #{tpu_custom_call.1}
  #allocation0 [shape = 'u32[]', space=smem, size = 0x4, offset = 0x4, fixed_abs, tag = 'smem constant byte address 0x4 - core index']
  #allocation1 [shape = 'u32[144,128]{1,0:T(1,128)}', space=vmem, size = 0x12000, scoped, tag = 'internal scratch']
  %s0 = inlined_call_operand.vmem [shape: f32[8,8], index: 0, kind: input, shape index: {}]
  %s1 = inlined_call_operand.vmem [shape: f32[8,32], index: 1, kind: input, shape index: {}]
  %s2 = inlined_call_operand.vmem [shape: bf16[8,32], index: 2, kind: input, shape index: {}]
  %s3 = inlined_call_operand.vmem [shape: f32[1,32], index: 3, kind: input, shape index: {}]
  %s4 = inlined_call_operand.vmem [shape: bf16[2,32,128], index: 4, kind: input, shape index: {}]
  %s5 = inlined_call_operand.vmem [shape: f32[2,1,128], index: 5, kind: input, shape index: {}]
  %s6 = inlined_call_operand.vmem [shape: bf16[2,4,8,32], index: 6, kind: input, shape index: {}]
  %s7 = inlined_call_operand.vmem [shape: bf16[2,32,128], index: 7, kind: input, shape index: {}]
  %s8 = inlined_call_operand.vmem [shape: f32[2,1,128], index: 8, kind: input, shape index: {}]
  %s9 = inlined_call_operand.vmem [shape: bf16[2,128,32], index: 9, kind: input, shape index: {}]
  %s10 = inlined_call_operand.vmem [shape: f32[2,6,32], index: 10, kind: input, shape index: {}]
  %s11 = inlined_call_operand.vmem [shape: bf16[32,128], index: 11, kind: input, shape index: {}]
  %s12 = inlined_call_operand.vmem [shape: f32[1,128], index: 12, kind: input, shape index: {}]
  %s13 = inlined_call_operand.hbm [shape: f32[8,128], index: 13, kind: output, shape index: {}]
  %s14 = sld [smem:[#allocation0]]
  $region62: #{tpu_custom_call.1} parent=0
    _
  %s16 = ssub.s32 1, %s14
  %s17 = scalar_select 0, %s16, %s14
  $region1: #{tpu_custom_call.1} parent=0
    #allocation2 [shape = 'u8[4096]{0}', space=vmem, size = 0x1000, scoped, tag = 'output window, operand 0, single buffered']
    #allocation3 [shape = 's32[1]{0}', space=sflag, size = 0x4, scoped, tag = 'scoped memory for tpu_custom_call.1']
    %18 = vsyncpa [#allocation3], 0
    // Predicated region
    $region2: #{tpu_custom_call.1} parent=1 // pred_check
      _
    $region3: #{tpu_custom_call.1} parent=1 // pred_check_branch
      %20 = sbr.rel (0) target = $region5
    $region4: #{tpu_custom_call.1} parent=1 // pred_region
      _
    $region5: #{tpu_custom_call.1} parent=1 // pred_fallthru
      _
    // Predicated region
    $region6: #{tpu_custom_call.1} parent=1 // pred_check
      _
    $region7: #{tpu_custom_call.1} parent=1 // pred_check_branch
      %22 = sbr.rel (0) target = $region9
    $region8: #{tpu_custom_call.1} parent=1 // pred_region
      _
    $region9: #{tpu_custom_call.1} parent=1 // pred_fallthru
      _
    // Predicated region
    $region10: #{tpu_custom_call.1} parent=1 // pred_check
      _
    $region11: #{tpu_custom_call.1} parent=1 // pred_check_branch
      %24 = sbr.rel (0) target = $region13
    $region12: #{tpu_custom_call.1} parent=1 // pred_region
      _
    $region13: #{tpu_custom_call.1} parent=1 // pred_fallthru
      _
    // Predicated region
    $region14: #{tpu_custom_call.1} parent=1 // pred_check
      _
    $region15: #{tpu_custom_call.1} parent=1 // pred_check_branch
      %26 = sbr.rel (0) target = $region17
    $region16: #{tpu_custom_call.1} parent=1 // pred_region
      _
    $region17: #{tpu_custom_call.1} parent=1 // pred_fallthru
      _
    // Predicated region
    $region18: #{tpu_custom_call.1} parent=1 // pred_check
      _
    $region19: #{tpu_custom_call.1} parent=1 // pred_check_branch
      %28 = sbr.rel (0) target = $region21
    $region20: #{tpu_custom_call.1} parent=1 // pred_region
      _
    $region21: #{tpu_custom_call.1} parent=1 // pred_fallthru
      _
    // Predicated region
    $region22: #{tpu_custom_call.1} parent=1 // pred_check
      _
    $region23: #{tpu_custom_call.1} parent=1 // pred_check_branch
      %30 = sbr.rel (0) target = $region25
    $region24: #{tpu_custom_call.1} parent=1 // pred_region
      _
    $region25: #{tpu_custom_call.1} parent=1 // pred_fallthru
      _
    // Predicated region
    $region26: #{tpu_custom_call.1} parent=1 // pred_check
      _
    $region27: #{tpu_custom_call.1} parent=1 // pred_check_branch
      %32 = sbr.rel (0) target = $region29
    $region28: #{tpu_custom_call.1} parent=1 // pred_region
      _
    $region29: #{tpu_custom_call.1} parent=1 // pred_fallthru
      _
    // Predicated region
    $region30: #{tpu_custom_call.1} parent=1 // pred_check
      _
    $region31: #{tpu_custom_call.1} parent=1 // pred_check_branch
      %34 = sbr.rel (0) target = $region33
    $region32: #{tpu_custom_call.1} parent=1 // pred_region
      _
    $region33: #{tpu_custom_call.1} parent=1 // pred_fallthru
      _
    // Predicated region
    $region34: #{tpu_custom_call.1} parent=1 // pred_check
      _
    $region35: #{tpu_custom_call.1} parent=1 // pred_check_branch
      %36 = sbr.rel (0) target = $region37
    $region36: #{tpu_custom_call.1} parent=1 // pred_region
      _
    $region37: #{tpu_custom_call.1} parent=1 // pred_fallthru
      _
    // Predicated region
    $region38: #{tpu_custom_call.1} parent=1 // pred_check
      _
    $region39: #{tpu_custom_call.1} parent=1 // pred_check_branch
      %38 = sbr.rel (0) target = $region41
    $region40: #{tpu_custom_call.1} parent=1 // pred_region
      _
    $region41: #{tpu_custom_call.1} parent=1 // pred_fallthru
      _
    // Predicated region
    $region42: #{tpu_custom_call.1} parent=1 // pred_check
      _
    $region43: #{tpu_custom_call.1} parent=1 // pred_check_branch
      %40 = sbr.rel (0) target = $region45
    $region44: #{tpu_custom_call.1} parent=1 // pred_region
      _
    $region45: #{tpu_custom_call.1} parent=1 // pred_fallthru
      _
    // Predicated region
    $region46: #{tpu_custom_call.1} parent=1 // pred_check
      _
    $region47: #{tpu_custom_call.1} parent=1 // pred_check_branch
      %42 = sbr.rel (0) target = $region49
    $region48: #{tpu_custom_call.1} parent=1 // pred_region
      _
    $region49: #{tpu_custom_call.1} parent=1 // pred_fallthru
      _
    // Predicated region
    $region50: #{tpu_custom_call.1} parent=1 // pred_check
      _
    $region51: #{tpu_custom_call.1} parent=1 // pred_check_branch
      %44 = sbr.rel (0) target = $region53
    $region52: #{tpu_custom_call.1} parent=1 // pred_region
      _
    $region53: #{tpu_custom_call.1} parent=1 // pred_fallthru
      _
    %v46 = vld [vmem:[%s0] sm:$0xff]
    %v47 = vpack.c.bf16 %v46, %v46
    %v48 = vld [vmem:[%s2] sm:$0xf]
    %v49 = vld [vmem:[%s3] sm:$0x1]
    %v51 = vlaneseq
    %v52 = vshrl.u32 %v51, 7
    %v53 = vsub.s32 0, %v52
    %v54 = vrot.slane %v49, %v53
    %vm56 = vcmask 64512
    %v58 = vsel %vm56, %v47, 0
    %vm60 = vcmask 1043456
    %v62 = vsel %vm60, %v48, 0
    %64 = vmatprep.subr.bf16.mxu0 0
    %65 = vmatpush1.bf16.msra.mxu0 %v62
    %66 = vmatprep.subr.bf16.mxu0 0
    %67 = vmatpush1.bf16.msra.mxu0 0
    %68 = vmatprep.subr.bf16.mxu0 0
    %69 = vmatpush1.bf16.msra.mxu0 0
    %70 = vmatprep.subr.bf16.mxu0 0
    %71 = vmatpush1.bf16.msra.mxu0 0
    %72 = vmatprep.subr.bf16.mxu0 0
    %73 = vmatpush1.bf16.msra.mxu0 0
    %74 = vmatprep.subr.bf16.mxu0 0
    %75 = vmatpush1.bf16.msra.mxu0 0
    %76 = vmatprep.subr.bf16.mxu0 0
    %77 = vmatpush1.bf16.msra.mxu0 0
    %78 = vmatprep.subr.bf16.mxu0 0
    %79 = vmatpush1.bf16.msra.mxu0 0
    %80 = vmatprep.subr.bf16.mxu0 0
    %81 = vmatpush1.bf16.msra.mxu0 0
    %82 = vmatprep.subr.bf16.mxu0 0
    %83 = vmatpush1.bf16.msra.mxu0 0
    %84 = vmatprep.subr.bf16.mxu0 0
    %85 = vmatpush1.bf16.msra.mxu0 0
    %86 = vmatprep.subr.bf16.mxu0 0
    %87 = vmatpush1.bf16.msra.mxu0 0
    %88 = vmatprep.subr.bf16.mxu0 0
    %89 = vmatpush1.bf16.msra.mxu0 0
    %90 = vmatprep.subr.bf16.mxu0 0
    %91 = vmatpush1.bf16.msra.mxu0 0
    %92 = vmatprep.subr.bf16.mxu0 0
    %93 = vmatpush1.bf16.msra.mxu0 0
    %94 = vmatprep.subr.bf16.mxu0 0
    %95 = vmatpush1.bf16.msra.mxu0 0
    %96 = vmatprep.mubr.bf16.mxu0 0
    %97 = vmatmul.mubr.bf16.gmra.mrb[0].mxu0 %v58
    %v98 = vpop.f32.mrb[0].mxu0
    %v99 = vadd.f32 %v54, %v98
    %v100 = vpop.f32.mrb[0].mxu0
    %v101 = vpop.f32.mrb[0].mxu0
    %v102 = vpop.f32.mrb[0].mxu0
    %103 = vdwg.mxu0
    %v104 = vld [vmem:[%s1] sm:$0xff]
    %v105 = vadd.f32 %v99, %v104
    %v106 = vld [vmem:[%s10] sm:$0x3f]
    %v107 = vld [vmem:[%s4] sm:$0xf]
    %v108 = vld [vmem:[%s4 + $0x4] sm:$0xf]
    %v109 = vld [vmem:[%s4 + $0x8] sm:$0xf]
    %v110 = vld [vmem:[%s4 + $0xc] sm:$0xf]
    %v111 = vld [vmem:[%s5] sm:$0x1]
    %v112 = vpack.c.bf16 %v105, %v105
    %v114 = vlaneseq
    %v115 = vshrl.u32 %v114, 7
    %v116 = vsub.s32 0, %v115
    %v117 = vrot.slane %v111, %v116
    %v123 = vunpack.c.l.b16 %v107
    %v124 = vunpack.c.l.b16 %v108
    %v125 = vunpack.c.l.b16 %v109
    %v126 = vunpack.c.l.b16 %v110
    %v127 = vpack.c.b16 %v124, %v123
    %v128 = vpack.c.b16 %v126, %v125
    %vm131 = vcmask 261120
    %v133 = vsel %vm131, %v112, 0
    %135 = vmatprep.subr.bf16.mxu0 0
    %136 = vmatpush1.bf16.msra.mxu0 %v127
    %137 = vmatprep.subr.bf16.mxu0 0
    %138 = vmatpush1.bf16.msra.mxu0 %v128
    %139 = vmatprep.subr.bf16.mxu0 0
    %140 = vmatpush1.bf16.msra.mxu0 0
    %141 = vmatprep.subr.bf16.mxu0 0
    %142 = vmatpush1.bf16.msra.mxu0 0
    %143 = vmatprep.subr.bf16.mxu0 0
    %144 = vmatpush1.bf16.msra.mxu0 0
    %145 = vmatprep.subr.bf16.mxu0 0
    %146 = vmatpush1.bf16.msra.mxu0 0
    %147 = vmatprep.subr.bf16.mxu0 0
    %148 = vmatpush1.bf16.msra.mxu0 0
    %149 = vmatprep.subr.bf16.mxu0 0
    %150 = vmatpush1.bf16.msra.mxu0 0
    %151 = vmatprep.subr.bf16.mxu0 0
    %152 = vmatpush1.bf16.msra.mxu0 0
    %153 = vmatprep.subr.bf16.mxu0 0
    %154 = vmatpush1.bf16.msra.mxu0 0
    %155 = vmatprep.subr.bf16.mxu0 0
    %156 = vmatpush1.bf16.msra.mxu0 0
    %157 = vmatprep.subr.bf16.mxu0 0
    %158 = vmatpush1.bf16.msra.mxu0 0
    %159 = vmatprep.subr.bf16.mxu0 0
    %160 = vmatpush1.bf16.msra.mxu0 0
    %161 = vmatprep.subr.bf16.mxu0 0
    %162 = vmatpush1.bf16.msra.mxu0 0
    %163 = vmatprep.subr.bf16.mxu0 0
    %164 = vmatpush1.bf16.msra.mxu0 0
    %165 = vmatprep.subr.bf16.mxu0 0
    %166 = vmatpush1.bf16.msra.mxu0 0
    %167 = vmatprep.mubr.bf16.mxu0 0
    %168 = vmatmul.mubr.bf16.gmra.mrb[0].mxu0 %v133
    %v169 = vpop.f32.mrb[0].mxu0
    %v170 = vadd.f32 %v117, %v169
    %v171 = vpop.f32.mrb[0].mxu0
    %v172 = vpop.f32.mrb[0].mxu0
    %v173 = vpop.f32.mrb[0].mxu0
    %174 = vdwg.mxu0
    %v175 = vpack.c.bf16 %v170, %v170
    %177 = vrot.lane.b32.xlu0 %v175, 120
    %v178 = vpop.permute.xlu0 %177
    %179 = vrot.lane.b32.xlu0 %v175, 112
    %v180 = vpop.permute.xlu0 %179
    %181 = vrot.lane.b32.xlu0 %v175, 104
    %v182 = vpop.permute.xlu0 %181
    %183 = vrot.lane.b32.xlu0 %v175, 96
    %v184 = vpop.permute.xlu0 %183
    %v186 = vsel %vm56, %v175, 0
    %v189 = vsel %vm56, %v184, 0
    %191 = vmatprep.subr.bf16.mxu0 0
    %192 = vmatpush1.bf16.xpose.msra.mxu0 %v189
    %193 = vmatprep.subr.bf16.mxu0 0
    %194 = vmatpush1.bf16.xpose.msra.mxu0 0
    %195 = vmatprep.subr.bf16.mxu0 0
    %196 = vmatpush1.bf16.xpose.msra.mxu0 0
    %197 = vmatprep.subr.bf16.mxu0 0
    %198 = vmatpush1.bf16.xpose.msra.mxu0 0
    %199 = vmatprep.subr.bf16.mxu0 0
    %200 = vmatpush1.bf16.xpose.msra.mxu0 0
    %201 = vmatprep.subr.bf16.mxu0 0
    %202 = vmatpush1.bf16.xpose.msra.mxu0 0
    %203 = vmatprep.subr.bf16.mxu0 0
    %204 = vmatpush1.bf16.xpose.msra.mxu0 0
    %205 = vmatprep.subr.bf16.mxu0 0
    %206 = vmatpush1.bf16.xpose.msra.mxu0 0
    %207 = vmatprep.subr.bf16.mxu0 0
    %208 = vmatpush1.bf16.xpose.msra.mxu0 0
    %209 = vmatprep.subr.bf16.mxu0 0
    %210 = vmatpush1.bf16.xpose.msra.mxu0 0
    %211 = vmatprep.subr.bf16.mxu0 0
    %212 = vmatpush1.bf16.xpose.msra.mxu0 0
    %213 = vmatprep.subr.bf16.mxu0 0
    %214 = vmatpush1.bf16.xpose.msra.mxu0 0
    %215 = vmatprep.subr.bf16.mxu0 0
    %216 = vmatpush1.bf16.xpose.msra.mxu0 0
    %217 = vmatprep.subr.bf16.mxu0 0
    %218 = vmatpush1.bf16.xpose.msra.mxu0 0
    %219 = vmatprep.subr.bf16.mxu0 0
    %220 = vmatpush1.bf16.xpose.msra.mxu0 0
    %221 = vmatprep.subr.bf16.mxu0 0
    %222 = vmatpush1.bf16.xpose.msra.mxu0 0
    %223 = vmatprep.mubr.bf16.mxu0 0
    %224 = vmatmul.mubr.bf16.gmra.mrb[0].mxu0 %v186
    %v225 = vpop.f32.mrb[0].mxu0
    %v226 = vadd.f32 0.0, %v225
    %v227 = vpop.f32.mrb[0].mxu0
    %v228 = vpop.f32.mrb[0].mxu0
    %v229 = vpop.f32.mrb[0].mxu0
    %230 = vdwg.mxu0
    %231 = vrot.lane.b32.xlu0 %v178, 96
    %v232 = vpop.permute.xlu0 %231
    %v234 = vsel %vm56, %v178, 0
    %v237 = vsel %vm56, %v232, 0
    %239 = vmatprep.subr.bf16.mxu0 0
    %240 = vmatpush1.bf16.xpose.msra.mxu0 %v237
    %241 = vmatprep.subr.bf16.mxu0 0
    %242 = vmatpush1.bf16.xpose.msra.mxu0 0
    %243 = vmatprep.subr.bf16.mxu0 0
    %244 = vmatpush1.bf16.xpose.msra.mxu0 0
    %245 = vmatprep.subr.bf16.mxu0 0
    %246 = vmatpush1.bf16.xpose.msra.mxu0 0
    %247 = vmatprep.subr.bf16.mxu0 0
    %248 = vmatpush1.bf16.xpose.msra.mxu0 0
    %249 = vmatprep.subr.bf16.mxu0 0
    %250 = vmatpush1.bf16.xpose.msra.mxu0 0
    %251 = vmatprep.subr.bf16.mxu0 0
    %252 = vmatpush1.bf16.xpose.msra.mxu0 0
    %253 = vmatprep.subr.bf16.mxu0 0
    %254 = vmatpush1.bf16.xpose.msra.mxu0 0
    %255 = vmatprep.subr.bf16.mxu0 0
    %256 = vmatpush1.bf16.xpose.msra.mxu0 0
    %257 = vmatprep.subr.bf16.mxu0 0
    %258 = vmatpush1.bf16.xpose.msra.mxu0 0
    %259 = vmatprep.subr.bf16.mxu0 0
    %260 = vmatpush1.bf16.xpose.msra.mxu0 0
    %261 = vmatprep.subr.bf16.mxu0 0
    %262 = vmatpush1.bf16.xpose.msra.mxu0 0
    %263 = vmatprep.subr.bf16.mxu0 0
    %264 = vmatpush1.bf16.xpose.msra.mxu0 0
    %265 = vmatprep.subr.bf16.mxu0 0
    %266 = vmatpush1.bf16.xpose.msra.mxu0 0
    %267 = vmatprep.subr.bf16.mxu0 0
    %268 = vmatpush1.bf16.xpose.msra.mxu0 0
    %269 = vmatprep.subr.bf16.mxu0 0
    %270 = vmatpush1.bf16.xpose.msra.mxu0 0
    %271 = vmatprep.mubr.bf16.mxu0 0
    %272 = vmatmul.mubr.bf16.gmra.mrb[0].mxu0 %v234
    %v273 = vpop.f32.mrb[0].mxu0
    %v274 = vadd.f32 0.0, %v273
    %v275 = vpop.f32.mrb[0].mxu0
    %v276 = vpop.f32.mrb[0].mxu0
    %v277 = vpop.f32.mrb[0].mxu0
    %278 = vdwg.mxu0
    %279 = vrot.lane.b32.xlu0 %v180, 96
    %v280 = vpop.permute.xlu0 %279
    %v282 = vsel %vm56, %v180, 0
    %v285 = vsel %vm56, %v280, 0
    %287 = vmatprep.subr.bf16.mxu0 0
    %288 = vmatpush1.bf16.xpose.msra.mxu0 %v285
    %289 = vmatprep.subr.bf16.mxu0 0
    %290 = vmatpush1.bf16.xpose.msra.mxu0 0
    %291 = vmatprep.subr.bf16.mxu0 0
    %292 = vmatpush1.bf16.xpose.msra.mxu0 0
    %293 = vmatprep.subr.bf16.mxu0 0
    %294 = vmatpush1.bf16.xpose.msra.mxu0 0
    %295 = vmatprep.subr.bf16.mxu0 0
    %296 = vmatpush1.bf16.xpose.msra.mxu0 0
    %297 = vmatprep.subr.bf16.mxu0 0
    %298 = vmatpush1.bf16.xpose.msra.mxu0 0
    %299 = vmatprep.subr.bf16.mxu0 0
    %300 = vmatpush1.bf16.xpose.msra.mxu0 0
    %301 = vmatprep.subr.bf16.mxu0 0
    %302 = vmatpush1.bf16.xpose.msra.mxu0 0
    %303 = vmatprep.subr.bf16.mxu0 0
    %304 = vmatpush1.bf16.xpose.msra.mxu0 0
    %305 = vmatprep.subr.bf16.mxu0 0
    %306 = vmatpush1.bf16.xpose.msra.mxu0 0
    %307 = vmatprep.subr.bf16.mxu0 0
    %308 = vmatpush1.bf16.xpose.msra.mxu0 0
    %309 = vmatprep.subr.bf16.mxu0 0
    %310 = vmatpush1.bf16.xpose.msra.mxu0 0
    %311 = vmatprep.subr.bf16.mxu0 0
    %312 = vmatpush1.bf16.xpose.msra.mxu0 0
    %313 = vmatprep.subr.bf16.mxu0 0
    %314 = vmatpush1.bf16.xpose.msra.mxu0 0
    %315 = vmatprep.subr.bf16.mxu0 0
    %316 = vmatpush1.bf16.xpose.msra.mxu0 0
    %317 = vmatprep.subr.bf16.mxu0 0
    %318 = vmatpush1.bf16.xpose.msra.mxu0 0
    %319 = vmatprep.mubr.bf16.mxu0 0
    %320 = vmatmul.mubr.bf16.gmra.mrb[0].mxu0 %v282
    %v321 = vpop.f32.mrb[0].mxu0
    %v322 = vadd.f32 0.0, %v321
    %v323 = vpop.f32.mrb[0].mxu0
    %v324 = vpop.f32.mrb[0].mxu0
    %v325 = vpop.f32.mrb[0].mxu0
    %326 = vdwg.mxu0
    %327 = vrot.lane.b32.xlu0 %v182, 96
    %v328 = vpop.permute.xlu0 %327
    %v330 = vsel %vm56, %v182, 0
    %v333 = vsel %vm56, %v328, 0
    %335 = vmatprep.subr.bf16.mxu0 0
    %336 = vmatpush1.bf16.xpose.msra.mxu0 %v333
    %337 = vmatprep.subr.bf16.mxu0 0
    %338 = vmatpush1.bf16.xpose.msra.mxu0 0
    %339 = vmatprep.subr.bf16.mxu0 0
    %340 = vmatpush1.bf16.xpose.msra.mxu0 0
    %341 = vmatprep.subr.bf16.mxu0 0
    %342 = vmatpush1.bf16.xpose.msra.mxu0 0
    %343 = vmatprep.subr.bf16.mxu0 0
    %344 = vmatpush1.bf16.xpose.msra.mxu0 0
    %345 = vmatprep.subr.bf16.mxu0 0
    %346 = vmatpush1.bf16.xpose.msra.mxu0 0
    %347 = vmatprep.subr.bf16.mxu0 0
    %348 = vmatpush1.bf16.xpose.msra.mxu0 0
    %349 = vmatprep.subr.bf16.mxu0 0
    %350 = vmatpush1.bf16.xpose.msra.mxu0 0
    %351 = vmatprep.subr.bf16.mxu0 0
    %352 = vmatpush1.bf16.xpose.msra.mxu0 0
    %353 = vmatprep.subr.bf16.mxu0 0
    %354 = vmatpush1.bf16.xpose.msra.mxu0 0
    %355 = vmatprep.subr.bf16.mxu0 0
    %356 = vmatpush1.bf16.xpose.msra.mxu0 0
    %357 = vmatprep.subr.bf16.mxu0 0
    %358 = vmatpush1.bf16.xpose.msra.mxu0 0
    %359 = vmatprep.subr.bf16.mxu0 0
    %360 = vmatpush1.bf16.xpose.msra.mxu0 0
    %361 = vmatprep.subr.bf16.mxu0 0
    %362 = vmatpush1.bf16.xpose.msra.mxu0 0
    %363 = vmatprep.subr.bf16.mxu0 0
    %364 = vmatpush1.bf16.xpose.msra.mxu0 0
    %365 = vmatprep.subr.bf16.mxu0 0
    %366 = vmatpush1.bf16.xpose.msra.mxu0 0
    %367 = vmatprep.mubr.bf16.mxu0 0
    %368 = vmatmul.mubr.bf16.gmra.mrb[0].mxu0 %v330
    %v369 = vpop.f32.mrb[0].mxu0
    %v370 = vadd.f32 0.0, %v369
    %v371 = vpop.f32.mrb[0].mxu0
    %v372 = vpop.f32.mrb[0].mxu0
    %v373 = vpop.f32.mrb[0].mxu0
    %374 = vdwg.mxu0
    %v375 = vsel %vm56, %v226, -inf
    %376 = vmax.xlane.f32.xlu0 %v375
    %v377 = vpop.xlane.xlu0 %376
    %v378 = vsel %vm56, %v274, -inf
    %379 = vmax.xlane.f32.xlu0 %v378
    %v380 = vpop.xlane.xlu0 %379
    %v381 = vsel %vm56, %v322, -inf
    %382 = vmax.xlane.f32.xlu0 %v381
    %v383 = vpop.xlane.xlu0 %382
    %v384 = vsel %vm56, %v370, -inf
    %385 = vmax.xlane.f32.xlu0 %v384
    %v386 = vpop.xlane.xlu0 %385
    %v387 = vsub.f32 %v226, %v377
    %v388 = vsub.f32 %v274, %v380
    %v389 = vsub.f32 %v322, %v383
    %v390 = vsub.f32 %v370, %v386
    %v391 = vmul.f32 %v387, 1.442695
    %v392 = vpow.pop %v391
    %v393 = vmul.f32 %v388, 1.442695
    %v394 = vpow.pop %v393
    %v395 = vmul.f32 %v389, 1.442695
    %v396 = vpow.pop %v395
    %v397 = vmul.f32 %v390, 1.442695
    %v398 = vpow.pop %v397
    %v399 = vsel %vm56, %v392, 0.0
    %400 = vadd.xlane.f32.xlu0 %v399
    %v401 = vpop.xlane.xlu0 %400
    %v402 = vsel %vm56, %v394, 0.0
    %403 = vadd.xlane.f32.xlu0 %v402
    %v404 = vpop.xlane.xlu0 %403
    %v405 = vsel %vm56, %v396, 0.0
    %406 = vadd.xlane.f32.xlu0 %v405
    %v407 = vpop.xlane.xlu0 %406
    %v408 = vsel %vm56, %v398, 0.0
    %409 = vadd.xlane.f32.xlu0 %v408
    %v410 = vpop.xlane.xlu0 %409
    %v411 = vrcp.pop %v401
    %v412 = vrcp.pop %v404
    %v413 = vrcp.pop %v407
    %v414 = vrcp.pop %v410
    %v415 = vmul.f32 %v392, %v411
    %v416 = vmul.f32 %v394, %v412
    %v417 = vmul.f32 %v396, %v413
    %v418 = vmul.f32 %v398, %v414
    %v419 = vpack.c.bf16 %v415, %v415
    %v420 = vpack.c.bf16 %v416, %v416
    %v421 = vpack.c.bf16 %v417, %v417
    %v422 = vpack.c.bf16 %v418, %v418
    %423 = vrot.lane.b32.xlu0 %v175, 64
    %v424 = vpop.permute.xlu0 %423
    %v426 = vsel %vm56, %v419, 0
    %v429 = vsel %vm60, %v424, 0
    %431 = vmatprep.subr.bf16.mxu0 0
    %432 = vmatpush1.bf16.msra.mxu0 %v429
    %433 = vmatprep.subr.bf16.mxu0 0
    %434 = vmatpush1.bf16.msra.mxu0 0
    %435 = vmatprep.subr.bf16.mxu0 0
    %436 = vmatpush1.bf16.msra.mxu0 0
    %437 = vmatprep.subr.bf16.mxu0 0
    %438 = vmatpush1.bf16.msra.mxu0 0
    %439 = vmatprep.subr.bf16.mxu0 0
    %440 = vmatpush1.bf16.msra.mxu0 0
    %441 = vmatprep.subr.bf16.mxu0 0
    %442 = vmatpush1.bf16.msra.mxu0 0
    %443 = vmatprep.subr.bf16.mxu0 0
    %444 = vmatpush1.bf16.msra.mxu0 0
    %445 = vmatprep.subr.bf16.mxu0 0
    %446 = vmatpush1.bf16.msra.mxu0 0
    %447 = vmatprep.subr.bf16.mxu0 0
    %448 = vmatpush1.bf16.msra.mxu0 0
    %449 = vmatprep.subr.bf16.mxu0 0
    %450 = vmatpush1.bf16.msra.mxu0 0
    %451 = vmatprep.subr.bf16.mxu0 0
    %452 = vmatpush1.bf16.msra.mxu0 0
    %453 = vmatprep.subr.bf16.mxu0 0
    %454 = vmatpush1.bf16.msra.mxu0 0
    %455 = vmatprep.subr.bf16.mxu0 0
    %456 = vmatpush1.bf16.msra.mxu0 0
    %457 = vmatprep.subr.bf16.mxu0 0
    %458 = vmatpush1.bf16.msra.mxu0 0
    %459 = vmatprep.subr.bf16.mxu0 0
    %460 = vmatpush1.bf16.msra.mxu0 0
    %461 = vmatprep.subr.bf16.mxu0 0
    %462 = vmatpush1.bf16.msra.mxu0 0
    %463 = vmatprep.mubr.bf16.mxu0 0
    %464 = vmatmul.mubr.bf16.gmra.mrb[0].mxu0 %v426
    %v465 = vpop.f32.mrb[0].mxu0
    %v466 = vadd.f32 0.0, %v465
    %v467 = vpop.f32.mrb[0].mxu0
    %v468 = vpop.f32.mrb[0].mxu0
    %v469 = vpop.f32.mrb[0].mxu0
    %470 = vdwg.mxu0
    %471 = vrot.lane.b32.xlu0 %v178, 64
    %v472 = vpop.permute.xlu0 %471
    %v474 = vsel %vm56, %v420, 0
    %v477 = vsel %vm60, %v472, 0
    %479 = vmatprep.subr.bf16.mxu0 0
    %480 = vmatpush1.bf16.msra.mxu0 %v477
    %481 = vmatprep.subr.bf16.mxu0 0
    %482 = vmatpush1.bf16.msra.mxu0 0
    %483 = vmatprep.subr.bf16.mxu0 0
    %484 = vmatpush1.bf16.msra.mxu0 0
    %485 = vmatprep.subr.bf16.mxu0 0
    %486 = vmatpush1.bf16.msra.mxu0 0
    %487 = vmatprep.subr.bf16.mxu0 0
    %488 = vmatpush1.bf16.msra.mxu0 0
    %489 = vmatprep.subr.bf16.mxu0 0
    %490 = vmatpush1.bf16.msra.mxu0 0
    %491 = vmatprep.subr.bf16.mxu0 0
    %492 = vmatpush1.bf16.msra.mxu0 0
    %493 = vmatprep.subr.bf16.mxu0 0
    %494 = vmatpush1.bf16.msra.mxu0 0
    %495 = vmatprep.subr.bf16.mxu0 0
    %496 = vmatpush1.bf16.msra.mxu0 0
    %497 = vmatprep.subr.bf16.mxu0 0
    %498 = vmatpush1.bf16.msra.mxu0 0
    %499 = vmatprep.subr.bf16.mxu0 0
    %500 = vmatpush1.bf16.msra.mxu0 0
    %501 = vmatprep.subr.bf16.mxu0 0
    %502 = vmatpush1.bf16.msra.mxu0 0
    %503 = vmatprep.subr.bf16.mxu0 0
    %504 = vmatpush1.bf16.msra.mxu0 0
    %505 = vmatprep.subr.bf16.mxu0 0
    %506 = vmatpush1.bf16.msra.mxu0 0
    %507 = vmatprep.subr.bf16.mxu0 0
    %508 = vmatpush1.bf16.msra.mxu0 0
    %509 = vmatprep.subr.bf16.mxu0 0
    %510 = vmatpush1.bf16.msra.mxu0 0
    %511 = vmatprep.mubr.bf16.mxu0 0
    %512 = vmatmul.mubr.bf16.gmra.mrb[0].mxu0 %v474
    %v513 = vpop.f32.mrb[0].mxu0
    %v514 = vadd.f32 0.0, %v513
    %v515 = vpop.f32.mrb[0].mxu0
    %v516 = vpop.f32.mrb[0].mxu0
    %v517 = vpop.f32.mrb[0].mxu0
    %518 = vdwg.mxu0
    %519 = vrot.lane.b32.xlu0 %v180, 64
    %v520 = vpop.permute.xlu0 %519
    %v522 = vsel %vm56, %v421, 0
    %v525 = vsel %vm60, %v520, 0
    %527 = vmatprep.subr.bf16.mxu0 0
    %528 = vmatpush1.bf16.msra.mxu0 %v525
    %529 = vmatprep.subr.bf16.mxu0 0
    %530 = vmatpush1.bf16.msra.mxu0 0
    %531 = vmatprep.subr.bf16.mxu0 0
    %532 = vmatpush1.bf16.msra.mxu0 0
    %533 = vmatprep.subr.bf16.mxu0 0
    %534 = vmatpush1.bf16.msra.mxu0 0
    %535 = vmatprep.subr.bf16.mxu0 0
    %536 = vmatpush1.bf16.msra.mxu0 0
    %537 = vmatprep.subr.bf16.mxu0 0
    %538 = vmatpush1.bf16.msra.mxu0 0
    %539 = vmatprep.subr.bf16.mxu0 0
    %540 = vmatpush1.bf16.msra.mxu0 0
    %541 = vmatprep.subr.bf16.mxu0 0
    %542 = vmatpush1.bf16.msra.mxu0 0
    %543 = vmatprep.subr.bf16.mxu0 0
    %544 = vmatpush1.bf16.msra.mxu0 0
    %545 = vmatprep.subr.bf16.mxu0 0
    %546 = vmatpush1.bf16.msra.mxu0 0
    %547 = vmatprep.subr.bf16.mxu0 0
    %548 = vmatpush1.bf16.msra.mxu0 0
    %549 = vmatprep.subr.bf16.mxu0 0
    %550 = vmatpush1.bf16.msra.mxu0 0
    %551 = vmatprep.subr.bf16.mxu0 0
    %552 = vmatpush1.bf16.msra.mxu0 0
    %553 = vmatprep.subr.bf16.mxu0 0
    %554 = vmatpush1.bf16.msra.mxu0 0
    %555 = vmatprep.subr.bf16.mxu0 0
    %556 = vmatpush1.bf16.msra.mxu0 0
    %557 = vmatprep.subr.bf16.mxu0 0
    %558 = vmatpush1.bf16.msra.mxu0 0
    %559 = vmatprep.mubr.bf16.mxu0 0
    %560 = vmatmul.mubr.bf16.gmra.mrb[0].mxu0 %v522
    %v561 = vpop.f32.mrb[0].mxu0
    %v562 = vadd.f32 0.0, %v561
    %v563 = vpop.f32.mrb[0].mxu0
    %v564 = vpop.f32.mrb[0].mxu0
    %v565 = vpop.f32.mrb[0].mxu0
    %566 = vdwg.mxu0
    %567 = vrot.lane.b32.xlu0 %v182, 64
    %v568 = vpop.permute.xlu0 %567
    %v570 = vsel %vm56, %v422, 0
    %v573 = vsel %vm60, %v568, 0
    %575 = vmatprep.subr.bf16.mxu0 0
    %576 = vmatpush1.bf16.msra.mxu0 %v573
    %577 = vmatprep.subr.bf16.mxu0 0
    %578 = vmatpush1.bf16.msra.mxu0 0
    %579 = vmatprep.subr.bf16.mxu0 0
    %580 = vmatpush1.bf16.msra.mxu0 0
    %581 = vmatprep.subr.bf16.mxu0 0
    %582 = vmatpush1.bf16.msra.mxu0 0
    %583 = vmatprep.subr.bf16.mxu0 0
    %584 = vmatpush1.bf16.msra.mxu0 0
    %585 = vmatprep.subr.bf16.mxu0 0
    %586 = vmatpush1.bf16.msra.mxu0 0
    %587 = vmatprep.subr.bf16.mxu0 0
    %588 = vmatpush1.bf16.msra.mxu0 0
    %589 = vmatprep.subr.bf16.mxu0 0
    %590 = vmatpush1.bf16.msra.mxu0 0
    %591 = vmatprep.subr.bf16.mxu0 0
    %592 = vmatpush1.bf16.msra.mxu0 0
    %593 = vmatprep.subr.bf16.mxu0 0
    %594 = vmatpush1.bf16.msra.mxu0 0
    %595 = vmatprep.subr.bf16.mxu0 0
    %596 = vmatpush1.bf16.msra.mxu0 0
    %597 = vmatprep.subr.bf16.mxu0 0
    %598 = vmatpush1.bf16.msra.mxu0 0
    %599 = vmatprep.subr.bf16.mxu0 0
    %600 = vmatpush1.bf16.msra.mxu0 0
    %601 = vmatprep.subr.bf16.mxu0 0
    %602 = vmatpush1.bf16.msra.mxu0 0
    %603 = vmatprep.subr.bf16.mxu0 0
    %604 = vmatpush1.bf16.msra.mxu0 0
    %605 = vmatprep.subr.bf16.mxu0 0
    %606 = vmatpush1.bf16.msra.mxu0 0
    %607 = vmatprep.mubr.bf16.mxu0 0
    %608 = vmatmul.mubr.bf16.gmra.mrb[0].mxu0 %v570
    %v609 = vpop.f32.mrb[0].mxu0
    %v610 = vadd.f32 0.0, %v609
    %v611 = vpop.f32.mrb[0].mxu0
    %v612 = vpop.f32.mrb[0].mxu0
    %v613 = vpop.f32.mrb[0].mxu0
    %614 = vdwg.mxu0
    %v615 = vld [vmem:[%s6] sm:$0xf]
    %v616 = vld [vmem:[%s6 + $0x4] sm:$0xf]
    %v617 = vld [vmem:[%s6 + $0x8] sm:$0xf]
    %v618 = vld [vmem:[%s6 + $0xc] sm:$0xf]
    %v619 = vld [vmem:[%s7] sm:$0xf]
    %v620 = vld [vmem:[%s7 + $0x4] sm:$0xf]
    %v621 = vld [vmem:[%s7 + $0x8] sm:$0xf]
    %v622 = vld [vmem:[%s7 + $0xc] sm:$0xf]
    %v623 = vld [vmem:[%s8] sm:$0x1]
    %v624 = vld [vmem:[%s9] sm:$0xf]
    %v625 = vld [vmem:[%s9 + $0x4] sm:$0xf]
    %v626 = vld [vmem:[%s9 + $0x8] sm:$0xf]
    %v627 = vld [vmem:[%s9 + $0xc] sm:$0xf]
    %v628 = vld [vmem:[%s9 + $0x10] sm:$0xf]
    %v629 = vld [vmem:[%s9 + $0x14] sm:$0xf]
    %v630 = vld [vmem:[%s9 + $0x18] sm:$0xf]
    %v631 = vld [vmem:[%s9 + $0x1c] sm:$0xf]
    %v632 = vld [vmem:[%s9 + $0x20] sm:$0xf]
    %v633 = vld [vmem:[%s9 + $0x24] sm:$0xf]
    %v634 = vld [vmem:[%s9 + $0x28] sm:$0xf]
    %v635 = vld [vmem:[%s9 + $0x2c] sm:$0xf]
    %v636 = vld [vmem:[%s9 + $0x30] sm:$0xf]
    %v637 = vld [vmem:[%s9 + $0x34] sm:$0xf]
    %v638 = vld [vmem:[%s9 + $0x38] sm:$0xf]
    %v639 = vld [vmem:[%s9 + $0x3c] sm:$0xf]
    %v640 = vpack.c.bf16 %v466, %v466
    %v641 = vpack.c.bf16 %v514, %v514
    %v642 = vpack.c.bf16 %v562, %v562
    %v643 = vpack.c.bf16 %v610, %v610
    %v645 = vsel %vm56, %v640, 0
    %v648 = vsel %vm60, %v615, 0
    %650 = vmatprep.subr.bf16.mxu0 0
    %651 = vmatpush1.bf16.msra.mxu0 %v648
    %652 = vmatprep.subr.bf16.mxu0 0
    %653 = vmatpush1.bf16.msra.mxu0 0
    %654 = vmatprep.subr.bf16.mxu0 0
    %655 = vmatpush1.bf16.msra.mxu0 0
    %656 = vmatprep.subr.bf16.mxu0 0
    %657 = vmatpush1.bf16.msra.mxu0 0
    %658 = vmatprep.subr.bf16.mxu0 0
    %659 = vmatpush1.bf16.msra.mxu0 0
    %660 = vmatprep.subr.bf16.mxu0 0
    %661 = vmatpush1.bf16.msra.mxu0 0
    %662 = vmatprep.subr.bf16.mxu0 0
    %663 = vmatpush1.bf16.msra.mxu0 0
    %664 = vmatprep.subr.bf16.mxu0 0
    %665 = vmatpush1.bf16.msra.mxu0 0
    %666 = vmatprep.subr.bf16.mxu0 0
    %667 = vmatpush1.bf16.msra.mxu0 0
    %668 = vmatprep.subr.bf16.mxu0 0
    %669 = vmatpush1.bf16.msra.mxu0 0
    %670 = vmatprep.subr.bf16.mxu0 0
    %671 = vmatpush1.bf16.msra.mxu0 0
    %672 = vmatprep.subr.bf16.mxu0 0
    %673 = vmatpush1.bf16.msra.mxu0 0
    %674 = vmatprep.subr.bf16.mxu0 0
    %675 = vmatpush1.bf16.msra.mxu0 0
    %676 = vmatprep.subr.bf16.mxu0 0
    %677 = vmatpush1.bf16.msra.mxu0 0
    %678 = vmatprep.subr.bf16.mxu0 0
    %679 = vmatpush1.bf16.msra.mxu0 0
    %680 = vmatprep.subr.bf16.mxu0 0
    %681 = vmatpush1.bf16.msra.mxu0 0
    %682 = vmatprep.mubr.bf16.mxu0 0
    %683 = vmatmul.mubr.bf16.gmra.mrb[0].mxu0 %v645
    %v684 = vpop.f32.mrb[0].mxu0
    %v685 = vadd.f32 0.0, %v684
    %v686 = vpop.f32.mrb[0].mxu0
    %v687 = vpop.f32.mrb[0].mxu0
    %v688 = vpop.f32.mrb[0].mxu0
    %689 = vdwg.mxu0
    %v691 = vsel %vm56, %v641, 0
    %v694 = vsel %vm60, %v616, 0
    %696 = vmatprep.subr.bf16.mxu0 0
    %697 = vmatpush1.bf16.msra.mxu0 %v694
    %698 = vmatprep.subr.bf16.mxu0 0
    %699 = vmatpush1.bf16.msra.mxu0 0
    %700 = vmatprep.subr.bf16.mxu0 0
    %701 = vmatpush1.bf16.msra.mxu0 0
    %702 = vmatprep.subr.bf16.mxu0 0
    %703 = vmatpush1.bf16.msra.mxu0 0
    %704 = vmatprep.subr.bf16.mxu0 0
    %705 = vmatpush1.bf16.msra.mxu0 0
    %706 = vmatprep.subr.bf16.mxu0 0
    %707 = vmatpush1.bf16.msra.mxu0 0
    %708 = vmatprep.subr.bf16.mxu0 0
    %709 = vmatpush1.bf16.msra.mxu0 0
    %710 = vmatprep.subr.bf16.mxu0 0
    %711 = vmatpush1.bf16.msra.mxu0 0
    %712 = vmatprep.subr.bf16.mxu0 0
    %713 = vmatpush1.bf16.msra.mxu0 0
    %714 = vmatprep.subr.bf16.mxu0 0
    %715 = vmatpush1.bf16.msra.mxu0 0
    %716 = vmatprep.subr.bf16.mxu0 0
    %717 = vmatpush1.bf16.msra.mxu0 0
    %718 = vmatprep.subr.bf16.mxu0 0
    %719 = vmatpush1.bf16.msra.mxu0 0
    %720 = vmatprep.subr.bf16.mxu0 0
    %721 = vmatpush1.bf16.msra.mxu0 0
    %722 = vmatprep.subr.bf16.mxu0 0
    %723 = vmatpush1.bf16.msra.mxu0 0
    %724 = vmatprep.subr.bf16.mxu0 0
    %725 = vmatpush1.bf16.msra.mxu0 0
    %726 = vmatprep.subr.bf16.mxu0 0
    %727 = vmatpush1.bf16.msra.mxu0 0
    %728 = vmatprep.mubr.bf16.mxu0 0
    %729 = vmatmul.mubr.bf16.gmra.mrb[0].mxu0 %v691
    %v730 = vpop.f32.mrb[0].mxu0
    %v731 = vadd.f32 0.0, %v730
    %v732 = vpop.f32.mrb[0].mxu0
    %v733 = vpop.f32.mrb[0].mxu0
    %v734 = vpop.f32.mrb[0].mxu0
    %735 = vdwg.mxu0
    %v737 = vsel %vm56, %v642, 0
    %v740 = vsel %vm60, %v617, 0
    %742 = vmatprep.subr.bf16.mxu0 0
    %743 = vmatpush1.bf16.msra.mxu0 %v740
    %744 = vmatprep.subr.bf16.mxu0 0
    %745 = vmatpush1.bf16.msra.mxu0 0
    %746 = vmatprep.subr.bf16.mxu0 0
    %747 = vmatpush1.bf16.msra.mxu0 0
    %748 = vmatprep.subr.bf16.mxu0 0
    %749 = vmatpush1.bf16.msra.mxu0 0
    %750 = vmatprep.subr.bf16.mxu0 0
    %751 = vmatpush1.bf16.msra.mxu0 0
    %752 = vmatprep.subr.bf16.mxu0 0
    %753 = vmatpush1.bf16.msra.mxu0 0
    %754 = vmatprep.subr.bf16.mxu0 0
    %755 = vmatpush1.bf16.msra.mxu0 0
    %756 = vmatprep.subr.bf16.mxu0 0
    %757 = vmatpush1.bf16.msra.mxu0 0
    %758 = vmatprep.subr.bf16.mxu0 0
    %759 = vmatpush1.bf16.msra.mxu0 0
    %760 = vmatprep.subr.bf16.mxu0 0
    %761 = vmatpush1.bf16.msra.mxu0 0
    %762 = vmatprep.subr.bf16.mxu0 0
    %763 = vmatpush1.bf16.msra.mxu0 0
    %764 = vmatprep.subr.bf16.mxu0 0
    %765 = vmatpush1.bf16.msra.mxu0 0
    %766 = vmatprep.subr.bf16.mxu0 0
    %767 = vmatpush1.bf16.msra.mxu0 0
    %768 = vmatprep.subr.bf16.mxu0 0
    %769 = vmatpush1.bf16.msra.mxu0 0
    %770 = vmatprep.subr.bf16.mxu0 0
    %771 = vmatpush1.bf16.msra.mxu0 0
    %772 = vmatprep.subr.bf16.mxu0 0
    %773 = vmatpush1.bf16.msra.mxu0 0
    %774 = vmatprep.mubr.bf16.mxu0 0
    %775 = vmatmul.mubr.bf16.gmra.mrb[0].mxu0 %v737
    %v776 = vpop.f32.mrb[0].mxu0
    %v777 = vadd.f32 0.0, %v776
    %v778 = vpop.f32.mrb[0].mxu0
    %v779 = vpop.f32.mrb[0].mxu0
    %v780 = vpop.f32.mrb[0].mxu0
    %781 = vdwg.mxu0
    %v783 = vsel %vm56, %v643, 0
    %v786 = vsel %vm60, %v618, 0
    %788 = vmatprep.subr.bf16.mxu0 0
    %789 = vmatpush1.bf16.msra.mxu0 %v786
    %790 = vmatprep.subr.bf16.mxu0 0
    %791 = vmatpush1.bf16.msra.mxu0 0
    %792 = vmatprep.subr.bf16.mxu0 0
    %793 = vmatpush1.bf16.msra.mxu0 0
    %794 = vmatprep.subr.bf16.mxu0 0
    %795 = vmatpush1.bf16.msra.mxu0 0
    %796 = vmatprep.subr.bf16.mxu0 0
    %797 = vmatpush1.bf16.msra.mxu0 0
    %798 = vmatprep.subr.bf16.mxu0 0
    %799 = vmatpush1.bf16.msra.mxu0 0
    %800 = vmatprep.subr.bf16.mxu0 0
    %801 = vmatpush1.bf16.msra.mxu0 0
    %802 = vmatprep.subr.bf16.mxu0 0
    %803 = vmatpush1.bf16.msra.mxu0 0
    %804 = vmatprep.subr.bf16.mxu0 0
    %805 = vmatpush1.bf16.msra.mxu0 0
    %806 = vmatprep.subr.bf16.mxu0 0
    %807 = vmatpush1.bf16.msra.mxu0 0
    %808 = vmatprep.subr.bf16.mxu0 0
    %809 = vmatpush1.bf16.msra.mxu0 0
    %810 = vmatprep.subr.bf16.mxu0 0
    %811 = vmatpush1.bf16.msra.mxu0 0
    %812 = vmatprep.subr.bf16.mxu0 0
    %813 = vmatpush1.bf16.msra.mxu0 0
    %814 = vmatprep.subr.bf16.mxu0 0
    %815 = vmatpush1.bf16.msra.mxu0 0
    %816 = vmatprep.subr.bf16.mxu0 0
    %817 = vmatpush1.bf16.msra.mxu0 0
    %818 = vmatprep.subr.bf16.mxu0 0
    %819 = vmatpush1.bf16.msra.mxu0 0
    %820 = vmatprep.mubr.bf16.mxu0 0
    %821 = vmatmul.mubr.bf16.gmra.mrb[0].mxu0 %v783
    %v822 = vpop.f32.mrb[0].mxu0
    %v823 = vadd.f32 0.0, %v822
    %v824 = vpop.f32.mrb[0].mxu0
    %v825 = vpop.f32.mrb[0].mxu0
    %v826 = vpop.f32.mrb[0].mxu0
    %827 = vdwg.mxu0
    %v828 = vsel %vm131, %v685, 0.0
    %v829 = vsel %vm131, %v731, 0.0
    %v830 = vadd.f32 %v828, %v829
    %v831 = vsel %vm131, %v777, 0.0
    %v832 = vadd.f32 %v830, %v831
    %v833 = vsel %vm131, %v823, 0.0
    %v834 = vadd.f32 %v832, %v833
    %v835 = vlaneseq
    %v836 = vshrl.u32 %v835, 7
    %v837 = vsub.s32 0, %v836
    %v838 = vrot.slane %v106, %v837
    %v839 = vadd.f32 %v834, %v838
    %v840 = vadd.f32 %v105, %v839
    %v841 = vsel %vm131, %v840, 0.0
    %842 = vadd.xlane.f32.xlu0 %v841
    %v843 = vpop.xlane.xlu0 %842
    %v844 = vrcp.pop 32.0
    %v845 = vmul.f32 %v843, %v844
    %v846 = vsub.f32 %v840, %v845
    %v847 = vmul.f32 %v846, %v846
    %v848 = vsel %vm131, %v847, 0.0
    %849 = vadd.xlane.f32.xlu0 %v848
    %v850 = vpop.xlane.xlu0 %849
    %v851 = vmul.f32 %v850, %v844
    %v852 = vadd.f32 %v851, 1e-05
    %v853 = vrsqrt.pop %v852
    %v854 = vmul.f32 %v846, %v853
    %v855 = vlaneseq
    %v856 = vshrl.u32 %v855, 7
    %v857 = vsub.s32 1, %v856
    %v858 = vrot.slane %v106, %v857
    %v859 = vmul.f32 %v854, %v858
    %v860 = vlaneseq
    %v861 = vshrl.u32 %v860, 7
    %v862 = vsub.s32 2, %v861
    %v863 = vrot.slane %v106, %v862
    %v864 = vadd.f32 %v859, %v863
    %v865 = vpack.c.bf16 %v864, %v864
    %v867 = vlaneseq
    %v868 = vshrl.u32 %v867, 7
    %v869 = vsub.s32 0, %v868
    %v870 = vrot.slane %v623, %v869
    %v876 = vunpack.c.l.b16 %v619
    %v877 = vunpack.c.l.b16 %v620
    %v878 = vunpack.c.l.b16 %v621
    %v879 = vunpack.c.l.b16 %v622
    %v880 = vpack.c.b16 %v877, %v876
    %v881 = vpack.c.b16 %v879, %v878
    %v885 = vsel %vm131, %v865, 0
    %887 = vmatprep.subr.bf16.mxu0 0
    %888 = vmatpush1.bf16.msra.mxu0 %v880
    %889 = vmatprep.subr.bf16.mxu0 0
    %890 = vmatpush1.bf16.msra.mxu0 %v881
    %891 = vmatprep.subr.bf16.mxu0 0
    %892 = vmatpush1.bf16.msra.mxu0 0
    %893 = vmatprep.subr.bf16.mxu0 0
    %894 = vmatpush1.bf16.msra.mxu0 0
    %895 = vmatprep.subr.bf16.mxu0 0
    %896 = vmatpush1.bf16.msra.mxu0 0
    %897 = vmatprep.subr.bf16.mxu0 0
    %898 = vmatpush1.bf16.msra.mxu0 0
    %899 = vmatprep.subr.bf16.mxu0 0
    %900 = vmatpush1.bf16.msra.mxu0 0
    %901 = vmatprep.subr.bf16.mxu0 0
    %902 = vmatpush1.bf16.msra.mxu0 0
    %903 = vmatprep.subr.bf16.mxu0 0
    %904 = vmatpush1.bf16.msra.mxu0 0
    %905 = vmatprep.subr.bf16.mxu0 0
    %906 = vmatpush1.bf16.msra.mxu0 0
    %907 = vmatprep.subr.bf16.mxu0 0
    %908 = vmatpush1.bf16.msra.mxu0 0
    %909 = vmatprep.subr.bf16.mxu0 0
    %910 = vmatpush1.bf16.msra.mxu0 0
    %911 = vmatprep.subr.bf16.mxu0 0
    %912 = vmatpush1.bf16.msra.mxu0 0
    %913 = vmatprep.subr.bf16.mxu0 0
    %914 = vmatpush1.bf16.msra.mxu0 0
    %915 = vmatprep.subr.bf16.mxu0 0
    %916 = vmatpush1.bf16.msra.mxu0 0
    %917 = vmatprep.subr.bf16.mxu0 0
    %918 = vmatpush1.bf16.msra.mxu0 0
    %919 = vmatprep.mubr.bf16.mxu0 0
    %920 = vmatmul.mubr.bf16.gmra.mrb[0].mxu0 %v885
    %v921 = vpop.f32.mrb[0].mxu0
    %v922 = vadd.f32 %v870, %v921
    %v923 = vpop.f32.mrb[0].mxu0
    %v924 = vpop.f32.mrb[0].mxu0
    %v925 = vpop.f32.mrb[0].mxu0
    %926 = vdwg.mxu0
    %v927 = vmax.f32 %v922, 0.0
    %v928 = vpack.c.bf16 %v927, %v927
    %v929 = vlaneseq
    %v930 = vshrl.u32 %v929, 7
    %v931 = vsub.s32 5, %v930
    %v932 = vrot.slane %v106, %v931
    %v949 = vunpack.c.l.b16 %v624
    %v950 = vunpack.c.l.b16 %v625
    %v951 = vunpack.c.l.b16 %v626
    %v952 = vunpack.c.l.b16 %v627
    %v953 = vunpack.c.l.b16 %v628
    %v954 = vunpack.c.l.b16 %v629
    %v955 = vunpack.c.l.b16 %v630
    %v956 = vunpack.c.l.b16 %v631
    %v957 = vunpack.c.l.b16 %v632
    %v958 = vunpack.c.l.b16 %v633
    %v959 = vunpack.c.l.b16 %v634
    %v960 = vunpack.c.l.b16 %v635
    %v961 = vunpack.c.l.b16 %v636
    %v962 = vunpack.c.l.b16 %v637
    %v963 = vunpack.c.l.b16 %v638
    %v964 = vunpack.c.l.b16 %v639
    %v965 = vpack.c.b16 %v950, %v949
    %v966 = vpack.c.b16 %v952, %v951
    %v967 = vpack.c.b16 %v954, %v953
    %v968 = vpack.c.b16 %v956, %v955
    %v969 = vpack.c.b16 %v958, %v957
    %v970 = vpack.c.b16 %v960, %v959
    %v971 = vpack.c.b16 %v962, %v961
    %v972 = vpack.c.b16 %v964, %v963
    %981 = vmatprep.subr.bf16.mxu0 0
    %982 = vmatpush1.bf16.msra.mxu0 %v965
    %983 = vmatprep.subr.bf16.mxu0 0
    %984 = vmatpush1.bf16.msra.mxu0 %v966
    %985 = vmatprep.subr.bf16.mxu0 0
    %986 = vmatpush1.bf16.msra.mxu0 %v967
    %987 = vmatprep.subr.bf16.mxu0 0
    %988 = vmatpush1.bf16.msra.mxu0 %v968
    %989 = vmatprep.subr.bf16.mxu0 0
    %990 = vmatpush1.bf16.msra.mxu0 %v969
    %991 = vmatprep.subr.bf16.mxu0 0
    %992 = vmatpush1.bf16.msra.mxu0 %v970
    %993 = vmatprep.subr.bf16.mxu0 0
    %994 = vmatpush1.bf16.msra.mxu0 %v971
    %995 = vmatprep.subr.bf16.mxu0 0
    %996 = vmatpush1.bf16.msra.mxu0 %v972
    %997 = vmatprep.subr.bf16.mxu0 0
    %998 = vmatpush1.bf16.msra.mxu0 0
    %999 = vmatprep.subr.bf16.mxu0 0
    %1000 = vmatpush1.bf16.msra.mxu0 0
    %1001 = vmatprep.subr.bf16.mxu0 0
    %1002 = vmatpush1.bf16.msra.mxu0 0
    %1003 = vmatprep.subr.bf16.mxu0 0
    %1004 = vmatpush1.bf16.msra.mxu0 0
    %1005 = vmatprep.subr.bf16.mxu0 0
    %1006 = vmatpush1.bf16.msra.mxu0 0
    %1007 = vmatprep.subr.bf16.mxu0 0
    %1008 = vmatpush1.bf16.msra.mxu0 0
    %1009 = vmatprep.subr.bf16.mxu0 0
    %1010 = vmatpush1.bf16.msra.mxu0 0
    %1011 = vmatprep.subr.bf16.mxu0 0
    %1012 = vmatpush1.bf16.msra.mxu0 0
    %1013 = vmatprep.mubr.bf16.mxu0 0
    %1014 = vmatmul.mubr.bf16.gmra.mrb[0].mxu0 %v928
    %v1015 = vpop.f32.mrb[0].mxu0
    %v1016 = vadd.f32 %v932, %v1015
    %v1017 = vpop.f32.mrb[0].mxu0
    %v1018 = vpop.f32.mrb[0].mxu0
    %v1019 = vpop.f32.mrb[0].mxu0
    %1020 = vdwg.mxu0
    %v1021 = vadd.f32 %v864, %v1016
    %v1022 = vsel %vm131, %v1021, 0.0
    %1023 = vadd.xlane.f32.xlu0 %v1022
    %v1024 = vpop.xlane.xlu0 %1023
    %v1025 = vmul.f32 %v1024, %v844
    %v1026 = vsub.f32 %v1021, %v1025
    %v1027 = vmul.f32 %v1026, %v1026
    %v1028 = vsel %vm131, %v1027, 0.0
    %1029 = vadd.xlane.f32.xlu0 %v1028
    %v1030 = vpop.xlane.xlu0 %1029
    %v1031 = vmul.f32 %v1030, %v844
    %v1032 = vadd.f32 %v1031, 1e-05
    %v1033 = vrsqrt.pop %v1032
    %v1034 = vmul.f32 %v1026, %v1033
    %v1035 = vlaneseq
    %v1036 = vshrl.u32 %v1035, 7
    %v1037 = vsub.s32 3, %v1036
    %v1038 = vrot.slane %v106, %v1037
    %v1039 = vmul.f32 %v1034, %v1038
    %v1040 = vlaneseq
    %v1041 = vshrl.u32 %v1040, 7
    %v1042 = vsub.s32 4, %v1041
    %v1043 = vrot.slane %v106, %v1042
    %v1044 = vadd.f32 %v1039, %v1043
    %s1045 = scalar_lea.vmem %s10, 8
    %v1046 = vld [vmem:[%s1045] sm:$0x3f]
    %s1047 = scalar_lea.vmem %s4, 16
    %v1048 = vld [vmem:[%s1047] sm:$0xf]
    %v1049 = vld [vmem:[%s1047 + $0x4] sm:$0xf]
    %v1050 = vld [vmem:[%s1047 + $0x8] sm:$0xf]
    %v1051 = vld [vmem:[%s1047 + $0xc] sm:$0xf]
    %s1052 = scalar_lea.vmem %s5, 1
    %v1053 = vld [vmem:[%s1052] sm:$0x1]
    %v1054 = vpack.c.bf16 %v1044, %v1044
    %v1056 = vlaneseq
    %v1057 = vshrl.u32 %v1056, 7
    %v1058 = vsub.s32 0, %v1057
    %v1059 = vrot.slane %v1053, %v1058
    %v1065 = vunpack.c.l.b16 %v1048
    %v1066 = vunpack.c.l.b16 %v1049
    %v1067 = vunpack.c.l.b16 %v1050
    %v1068 = vunpack.c.l.b16 %v1051
    %v1069 = vpack.c.b16 %v1066, %v1065
    %v1070 = vpack.c.b16 %v1068, %v1067
    %v1074 = vsel %vm131, %v1054, 0
    %1076 = vmatprep.subr.bf16.mxu0 0
    %1077 = vmatpush1.bf16.msra.mxu0 %v1069
    %1078 = vmatprep.subr.bf16.mxu0 0
    %1079 = vmatpush1.bf16.msra.mxu0 %v1070
    %1080 = vmatprep.subr.bf16.mxu0 0
    %1081 = vmatpush1.bf16.msra.mxu0 0
    %1082 = vmatprep.subr.bf16.mxu0 0
    %1083 = vmatpush1.bf16.msra.mxu0 0
    %1084 = vmatprep.subr.bf16.mxu0 0
    %1085 = vmatpush1.bf16.msra.mxu0 0
    %1086 = vmatprep.subr.bf16.mxu0 0
    %1087 = vmatpush1.bf16.msra.mxu0 0
    %1088 = vmatprep.subr.bf16.mxu0 0
    %1089 = vmatpush1.bf16.msra.mxu0 0
    %1090 = vmatprep.subr.bf16.mxu0 0
    %1091 = vmatpush1.bf16.msra.mxu0 0
    %1092 = vmatprep.subr.bf16.mxu0 0
    %1093 = vmatpush1.bf16.msra.mxu0 0
    %1094 = vmatprep.subr.bf16.mxu0 0
    %1095 = vmatpush1.bf16.msra.mxu0 0
    %1096 = vmatprep.subr.bf16.mxu0 0
    %1097 = vmatpush1.bf16.msra.mxu0 0
    %1098 = vmatprep.subr.bf16.mxu0 0
    %1099 = vmatpush1.bf16.msra.mxu0 0
    %1100 = vmatprep.subr.bf16.mxu0 0
    %1101 = vmatpush1.bf16.msra.mxu0 0
    %1102 = vmatprep.subr.bf16.mxu0 0
    %1103 = vmatpush1.bf16.msra.mxu0 0
    %1104 = vmatprep.subr.bf16.mxu0 0
    %1105 = vmatpush1.bf16.msra.mxu0 0
    %1106 = vmatprep.subr.bf16.mxu0 0
    %1107 = vmatpush1.bf16.msra.mxu0 0
    %1108 = vmatprep.mubr.bf16.mxu0 0
    %1109 = vmatmul.mubr.bf16.gmra.mrb[0].mxu0 %v1074
    %v1110 = vpop.f32.mrb[0].mxu0
    %v1111 = vadd.f32 %v1059, %v1110
    %v1112 = vpop.f32.mrb[0].mxu0
    %v1113 = vpop.f32.mrb[0].mxu0
    %v1114 = vpop.f32.mrb[0].mxu0
    %1115 = vdwg.mxu0
    %v1116 = vpack.c.bf16 %v1111, %v1111
    %1118 = vrot.lane.b32.xlu0 %v1116, 120
    %v1119 = vpop.permute.xlu0 %1118
    %1120 = vrot.lane.b32.xlu0 %v1116, 112
    %v1121 = vpop.permute.xlu0 %1120
    %1122 = vrot.lane.b32.xlu0 %v1116, 104
    %v1123 = vpop.permute.xlu0 %1122
    %1124 = vrot.lane.b32.xlu0 %v1116, 96
    %v1125 = vpop.permute.xlu0 %1124
    %v1127 = vsel %vm56, %v1116, 0
    %v1130 = vsel %vm56, %v1125, 0
    %1132 = vmatprep.subr.bf16.mxu0 0
    %1133 = vmatpush1.bf16.xpose.msra.mxu0 %v1130
    %1134 = vmatprep.subr.bf16.mxu0 0
    %1135 = vmatpush1.bf16.xpose.msra.mxu0 0
    %1136 = vmatprep.subr.bf16.mxu0 0
    %1137 = vmatpush1.bf16.xpose.msra.mxu0 0
    %1138 = vmatprep.subr.bf16.mxu0 0
    %1139 = vmatpush1.bf16.xpose.msra.mxu0 0
    %1140 = vmatprep.subr.bf16.mxu0 0
    %1141 = vmatpush1.bf16.xpose.msra.mxu0 0
    %1142 = vmatprep.subr.bf16.mxu0 0
    %1143 = vmatpush1.bf16.xpose.msra.mxu0 0
    %1144 = vmatprep.subr.bf16.mxu0 0
    %1145 = vmatpush1.bf16.xpose.msra.mxu0 0
    %1146 = vmatprep.subr.bf16.mxu0 0
    %1147 = vmatpush1.bf16.xpose.msra.mxu0 0
    %1148 = vmatprep.subr.bf16.mxu0 0
    %1149 = vmatpush1.bf16.xpose.msra.mxu0 0
    %1150 = vmatprep.subr.bf16.mxu0 0
    %1151 = vmatpush1.bf16.xpose.msra.mxu0 0
    %1152 = vmatprep.subr.bf16.mxu0 0
    %1153 = vmatpush1.bf16.xpose.msra.mxu0 0
    %1154 = vmatprep.subr.bf16.mxu0 0
    %1155 = vmatpush1.bf16.xpose.msra.mxu0 0
    %1156 = vmatprep.subr.bf16.mxu0 0
    %1157 = vmatpush1.bf16.xpose.msra.mxu0 0
    %1158 = vmatprep.subr.bf16.mxu0 0
    %1159 = vmatpush1.bf16.xpose.msra.mxu0 0
    %1160 = vmatprep.subr.bf16.mxu0 0
    %1161 = vmatpush1.bf16.xpose.msra.mxu0 0
    %1162 = vmatprep.subr.bf16.mxu0 0
    %1163 = vmatpush1.bf16.xpose.msra.mxu0 0
    %1164 = vmatprep.mubr.bf16.mxu0 0
    %1165 = vmatmul.mubr.bf16.gmra.mrb[0].mxu0 %v1127
    %v1166 = vpop.f32.mrb[0].mxu0
    %v1167 = vadd.f32 0.0, %v1166
    %v1168 = vpop.f32.mrb[0].mxu0
    %v1169 = vpop.f32.mrb[0].mxu0
    %v1170 = vpop.f32.mrb[0].mxu0
    %1171 = vdwg.mxu0
    %1172 = vrot.lane.b32.xlu0 %v1119, 96
    %v1173 = vpop.permute.xlu0 %1172
    %v1175 = vsel %vm56, %v1119, 0
    %v1178 = vsel %vm56, %v1173, 0
    %1180 = vmatprep.subr.bf16.mxu0 0
    %1181 = vmatpush1.bf16.xpose.msra.mxu0 %v1178
    %1182 = vmatprep.subr.bf16.mxu0 0
    %1183 = vmatpush1.bf16.xpose.msra.mxu0 0
    %1184 = vmatprep.subr.bf16.mxu0 0
    %1185 = vmatpush1.bf16.xpose.msra.mxu0 0
    %1186 = vmatprep.subr.bf16.mxu0 0
    %1187 = vmatpush1.bf16.xpose.msra.mxu0 0
    %1188 = vmatprep.subr.bf16.mxu0 0
    %1189 = vmatpush1.bf16.xpose.msra.mxu0 0
    %1190 = vmatprep.subr.bf16.mxu0 0
    %1191 = vmatpush1.bf16.xpose.msra.mxu0 0
    %1192 = vmatprep.subr.bf16.mxu0 0
    %1193 = vmatpush1.bf16.xpose.msra.mxu0 0
    %1194 = vmatprep.subr.bf16.mxu0 0
    %1195 = vmatpush1.bf16.xpose.msra.mxu0 0
    %1196 = vmatprep.subr.bf16.mxu0 0
    %1197 = vmatpush1.bf16.xpose.msra.mxu0 0
    %1198 = vmatprep.subr.bf16.mxu0 0
    %1199 = vmatpush1.bf16.xpose.msra.mxu0 0
    %1200 = vmatprep.subr.bf16.mxu0 0
    %1201 = vmatpush1.bf16.xpose.msra.mxu0 0
    %1202 = vmatprep.subr.bf16.mxu0 0
    %1203 = vmatpush1.bf16.xpose.msra.mxu0 0
    %1204 = vmatprep.subr.bf16.mxu0 0
    %1205 = vmatpush1.bf16.xpose.msra.mxu0 0
    %1206 = vmatprep.subr.bf16.mxu0 0
    %1207 = vmatpush1.bf16.xpose.msra.mxu0 0
    %1208 = vmatprep.subr.bf16.mxu0 0
    %1209 = vmatpush1.bf16.xpose.msra.mxu0 0
    %1210 = vmatprep.subr.bf16.mxu0 0
    %1211 = vmatpush1.bf16.xpose.msra.mxu0 0
    %1212 = vmatprep.mubr.bf16.mxu0 0
    %1213 = vmatmul.mubr.bf16.gmra.mrb[0].mxu0 %v1175
    %v1214 = vpop.f32.mrb[0].mxu0
    %v1215 = vadd.f32 0.0, %v1214
    %v1216 = vpop.f32.mrb[0].mxu0
    %v1217 = vpop.f32.mrb[0].mxu0
    %v1218 = vpop.f32.mrb[0].mxu0
    %1219 = vdwg.mxu0
    %1220 = vrot.lane.b32.xlu0 %v1121, 96
    %v1221 = vpop.permute.xlu0 %1220
    %v1223 = vsel %vm56, %v1121, 0
    %v1226 = vsel %vm56, %v1221, 0
    %1228 = vmatprep.subr.bf16.mxu0 0
    %1229 = vmatpush1.bf16.xpose.msra.mxu0 %v1226
    %1230 = vmatprep.subr.bf16.mxu0 0
    %1231 = vmatpush1.bf16.xpose.msra.mxu0 0
    %1232 = vmatprep.subr.bf16.mxu0 0
    %1233 = vmatpush1.bf16.xpose.msra.mxu0 0
    %1234 = vmatprep.subr.bf16.mxu0 0
    %1235 = vmatpush1.bf16.xpose.msra.mxu0 0
    %1236 = vmatprep.subr.bf16.mxu0 0
    %1237 = vmatpush1.bf16.xpose.msra.mxu0 0
    %1238 = vmatprep.subr.bf16.mxu0 0
    %1239 = vmatpush1.bf16.xpose.msra.mxu0 0
    %1240 = vmatprep.subr.bf16.mxu0 0
    %1241 = vmatpush1.bf16.xpose.msra.mxu0 0
    %1242 = vmatprep.subr.bf16.mxu0 0
    %1243 = vmatpush1.bf16.xpose.msra.mxu0 0
    %1244 = vmatprep.subr.bf16.mxu0 0
    %1245 = vmatpush1.bf16.xpose.msra.mxu0 0
    %1246 = vmatprep.subr.bf16.mxu0 0
    %1247 = vmatpush1.bf16.xpose.msra.mxu0 0
    %1248 = vmatprep.subr.bf16.mxu0 0
    %1249 = vmatpush1.bf16.xpose.msra.mxu0 0
    %1250 = vmatprep.subr.bf16.mxu0 0
    %1251 = vmatpush1.bf16.xpose.msra.mxu0 0
    %1252 = vmatprep.subr.bf16.mxu0 0
    %1253 = vmatpush1.bf16.xpose.msra.mxu0 0
    %1254 = vmatprep.subr.bf16.mxu0 0
    %1255 = vmatpush1.bf16.xpose.msra.mxu0 0
    %1256 = vmatprep.subr.bf16.mxu0 0
    %1257 = vmatpush1.bf16.xpose.msra.mxu0 0
    %1258 = vmatprep.subr.bf16.mxu0 0
    %1259 = vmatpush1.bf16.xpose.msra.mxu0 0
    %1260 = vmatprep.mubr.bf16.mxu0 0
    %1261 = vmatmul.mubr.bf16.gmra.mrb[0].mxu0 %v1223
    %v1262 = vpop.f32.mrb[0].mxu0
    %v1263 = vadd.f32 0.0, %v1262
    %v1264 = vpop.f32.mrb[0].mxu0
    %v1265 = vpop.f32.mrb[0].mxu0
    %v1266 = vpop.f32.mrb[0].mxu0
    %1267 = vdwg.mxu0
    %1268 = vrot.lane.b32.xlu0 %v1123, 96
    %v1269 = vpop.permute.xlu0 %1268
    %v1271 = vsel %vm56, %v1123, 0
    %v1274 = vsel %vm56, %v1269, 0
    %1276 = vmatprep.subr.bf16.mxu0 0
    %1277 = vmatpush1.bf16.xpose.msra.mxu0 %v1274
    %1278 = vmatprep.subr.bf16.mxu0 0
    %1279 = vmatpush1.bf16.xpose.msra.mxu0 0
    %1280 = vmatprep.subr.bf16.mxu0 0
    %1281 = vmatpush1.bf16.xpose.msra.mxu0 0
    %1282 = vmatprep.subr.bf16.mxu0 0
    %1283 = vmatpush1.bf16.xpose.msra.mxu0 0
    %1284 = vmatprep.subr.bf16.mxu0 0
    %1285 = vmatpush1.bf16.xpose.msra.mxu0 0
    %1286 = vmatprep.subr.bf16.mxu0 0
    %1287 = vmatpush1.bf16.xpose.msra.mxu0 0
    %1288 = vmatprep.subr.bf16.mxu0 0
    %1289 = vmatpush1.bf16.xpose.msra.mxu0 0
    %1290 = vmatprep.subr.bf16.mxu0 0
    %1291 = vmatpush1.bf16.xpose.msra.mxu0 0
    %1292 = vmatprep.subr.bf16.mxu0 0
    %1293 = vmatpush1.bf16.xpose.msra.mxu0 0
    %1294 = vmatprep.subr.bf16.mxu0 0
    %1295 = vmatpush1.bf16.xpose.msra.mxu0 0
    %1296 = vmatprep.subr.bf16.mxu0 0
    %1297 = vmatpush1.bf16.xpose.msra.mxu0 0
    %1298 = vmatprep.subr.bf16.mxu0 0
    %1299 = vmatpush1.bf16.xpose.msra.mxu0 0
    %1300 = vmatprep.subr.bf16.mxu0 0
    %1301 = vmatpush1.bf16.xpose.msra.mxu0 0
    %1302 = vmatprep.subr.bf16.mxu0 0
    %1303 = vmatpush1.bf16.xpose.msra.mxu0 0
    %1304 = vmatprep.subr.bf16.mxu0 0
    %1305 = vmatpush1.bf16.xpose.msra.mxu0 0
    %1306 = vmatprep.subr.bf16.mxu0 0
    %1307 = vmatpush1.bf16.xpose.msra.mxu0 0
    %1308 = vmatprep.mubr.bf16.mxu0 0
    %1309 = vmatmul.mubr.bf16.gmra.mrb[0].mxu0 %v1271
    %v1310 = vpop.f32.mrb[0].mxu0
    %v1311 = vadd.f32 0.0, %v1310
    %v1312 = vpop.f32.mrb[0].mxu0
    %v1313 = vpop.f32.mrb[0].mxu0
    %v1314 = vpop.f32.mrb[0].mxu0
    %1315 = vdwg.mxu0
    %v1316 = vsel %vm56, %v1167, -inf
    %1317 = vmax.xlane.f32.xlu0 %v1316
    %v1318 = vpop.xlane.xlu0 %1317
    %v1319 = vsel %vm56, %v1215, -inf
    %1320 = vmax.xlane.f32.xlu0 %v1319
    %v1321 = vpop.xlane.xlu0 %1320
    %v1322 = vsel %vm56, %v1263, -inf
    %1323 = vmax.xlane.f32.xlu0 %v1322
    %v1324 = vpop.xlane.xlu0 %1323
    %v1325 = vsel %vm56, %v1311, -inf
    %1326 = vmax.xlane.f32.xlu0 %v1325
    %v1327 = vpop.xlane.xlu0 %1326
    %v1328 = vsub.f32 %v1167, %v1318
    %v1329 = vsub.f32 %v1215, %v1321
    %v1330 = vsub.f32 %v1263, %v1324
    %v1331 = vsub.f32 %v1311, %v1327
    %v1332 = vmul.f32 %v1328, 1.442695
    %v1333 = vpow.pop %v1332
    %v1334 = vmul.f32 %v1329, 1.442695
    %v1335 = vpow.pop %v1334
    %v1336 = vmul.f32 %v1330, 1.442695
    %v1337 = vpow.pop %v1336
    %v1338 = vmul.f32 %v1331, 1.442695
    %v1339 = vpow.pop %v1338
    %v1340 = vsel %vm56, %v1333, 0.0
    %1341 = vadd.xlane.f32.xlu0 %v1340
    %v1342 = vpop.xlane.xlu0 %1341
    %v1343 = vsel %vm56, %v1335, 0.0
    %1344 = vadd.xlane.f32.xlu0 %v1343
    %v1345 = vpop.xlane.xlu0 %1344
    %v1346 = vsel %vm56, %v1337, 0.0
    %1347 = vadd.xlane.f32.xlu0 %v1346
    %v1348 = vpop.xlane.xlu0 %1347
    %v1349 = vsel %vm56, %v1339, 0.0
    %1350 = vadd.xlane.f32.xlu0 %v1349
    %v1351 = vpop.xlane.xlu0 %1350
    %v1352 = vrcp.pop %v1342
    %v1353 = vrcp.pop %v1345
    %v1354 = vrcp.pop %v1348
    %v1355 = vrcp.pop %v1351
    %v1356 = vmul.f32 %v1333, %v1352
    %v1357 = vmul.f32 %v1335, %v1353
    %v1358 = vmul.f32 %v1337, %v1354
    %v1359 = vmul.f32 %v1339, %v1355
    %v1360 = vpack.c.bf16 %v1356, %v1356
    %v1361 = vpack.c.bf16 %v1357, %v1357
    %v1362 = vpack.c.bf16 %v1358, %v1358
    %v1363 = vpack.c.bf16 %v1359, %v1359
    %1364 = vrot.lane.b32.xlu0 %v1116, 64
    %v1365 = vpop.permute.xlu0 %1364
    %v1367 = vsel %vm56, %v1360, 0
    %v1370 = vsel %vm60, %v1365, 0
    %1372 = vmatprep.subr.bf16.mxu0 0
    %1373 = vmatpush1.bf16.msra.mxu0 %v1370
    %1374 = vmatprep.subr.bf16.mxu0 0
    %1375 = vmatpush1.bf16.msra.mxu0 0
    %1376 = vmatprep.subr.bf16.mxu0 0
    %1377 = vmatpush1.bf16.msra.mxu0 0
    %1378 = vmatprep.subr.bf16.mxu0 0
    %1379 = vmatpush1.bf16.msra.mxu0 0
    %1380 = vmatprep.subr.bf16.mxu0 0
    %1381 = vmatpush1.bf16.msra.mxu0 0
    %1382 = vmatprep.subr.bf16.mxu0 0
    %1383 = vmatpush1.bf16.msra.mxu0 0
    %1384 = vmatprep.subr.bf16.mxu0 0
    %1385 = vmatpush1.bf16.msra.mxu0 0
    %1386 = vmatprep.subr.bf16.mxu0 0
    %1387 = vmatpush1.bf16.msra.mxu0 0
    %1388 = vmatprep.subr.bf16.mxu0 0
    %1389 = vmatpush1.bf16.msra.mxu0 0
    %1390 = vmatprep.subr.bf16.mxu0 0
    %1391 = vmatpush1.bf16.msra.mxu0 0
    %1392 = vmatprep.subr.bf16.mxu0 0
    %1393 = vmatpush1.bf16.msra.mxu0 0
    %1394 = vmatprep.subr.bf16.mxu0 0
    %1395 = vmatpush1.bf16.msra.mxu0 0
    %1396 = vmatprep.subr.bf16.mxu0 0
    %1397 = vmatpush1.bf16.msra.mxu0 0
    %1398 = vmatprep.subr.bf16.mxu0 0
    %1399 = vmatpush1.bf16.msra.mxu0 0
    %1400 = vmatprep.subr.bf16.mxu0 0
    %1401 = vmatpush1.bf16.msra.mxu0 0
    %1402 = vmatprep.subr.bf16.mxu0 0
    %1403 = vmatpush1.bf16.msra.mxu0 0
    %1404 = vmatprep.mubr.bf16.mxu0 0
    %1405 = vmatmul.mubr.bf16.gmra.mrb[0].mxu0 %v1367
    %v1406 = vpop.f32.mrb[0].mxu0
    %v1407 = vadd.f32 0.0, %v1406
    %v1408 = vpop.f32.mrb[0].mxu0
    %v1409 = vpop.f32.mrb[0].mxu0
    %v1410 = vpop.f32.mrb[0].mxu0
    %1411 = vdwg.mxu0
    %1412 = vrot.lane.b32.xlu0 %v1119, 64
    %v1413 = vpop.permute.xlu0 %1412
    %v1415 = vsel %vm56, %v1361, 0
    %v1418 = vsel %vm60, %v1413, 0
    %1420 = vmatprep.subr.bf16.mxu0 0
    %1421 = vmatpush1.bf16.msra.mxu0 %v1418
    %1422 = vmatprep.subr.bf16.mxu0 0
    %1423 = vmatpush1.bf16.msra.mxu0 0
    %1424 = vmatprep.subr.bf16.mxu0 0
    %1425 = vmatpush1.bf16.msra.mxu0 0
    %1426 = vmatprep.subr.bf16.mxu0 0
    %1427 = vmatpush1.bf16.msra.mxu0 0
    %1428 = vmatprep.subr.bf16.mxu0 0
    %1429 = vmatpush1.bf16.msra.mxu0 0
    %1430 = vmatprep.subr.bf16.mxu0 0
    %1431 = vmatpush1.bf16.msra.mxu0 0
    %1432 = vmatprep.subr.bf16.mxu0 0
    %1433 = vmatpush1.bf16.msra.mxu0 0
    %1434 = vmatprep.subr.bf16.mxu0 0
    %1435 = vmatpush1.bf16.msra.mxu0 0
    %1436 = vmatprep.subr.bf16.mxu0 0
    %1437 = vmatpush1.bf16.msra.mxu0 0
    %1438 = vmatprep.subr.bf16.mxu0 0
    %1439 = vmatpush1.bf16.msra.mxu0 0
    %1440 = vmatprep.subr.bf16.mxu0 0
    %1441 = vmatpush1.bf16.msra.mxu0 0
    %1442 = vmatprep.subr.bf16.mxu0 0
    %1443 = vmatpush1.bf16.msra.mxu0 0
    %1444 = vmatprep.subr.bf16.mxu0 0
    %1445 = vmatpush1.bf16.msra.mxu0 0
    %1446 = vmatprep.subr.bf16.mxu0 0
    %1447 = vmatpush1.bf16.msra.mxu0 0
    %1448 = vmatprep.subr.bf16.mxu0 0
    %1449 = vmatpush1.bf16.msra.mxu0 0
    %1450 = vmatprep.subr.bf16.mxu0 0
    %1451 = vmatpush1.bf16.msra.mxu0 0
    %1452 = vmatprep.mubr.bf16.mxu0 0
    %1453 = vmatmul.mubr.bf16.gmra.mrb[0].mxu0 %v1415
    %v1454 = vpop.f32.mrb[0].mxu0
    %v1455 = vadd.f32 0.0, %v1454
    %v1456 = vpop.f32.mrb[0].mxu0
    %v1457 = vpop.f32.mrb[0].mxu0
    %v1458 = vpop.f32.mrb[0].mxu0
    %1459 = vdwg.mxu0
    %1460 = vrot.lane.b32.xlu0 %v1121, 64
    %v1461 = vpop.permute.xlu0 %1460
    %v1463 = vsel %vm56, %v1362, 0
    %v1466 = vsel %vm60, %v1461, 0
    %1468 = vmatprep.subr.bf16.mxu0 0
    %1469 = vmatpush1.bf16.msra.mxu0 %v1466
    %1470 = vmatprep.subr.bf16.mxu0 0
    %1471 = vmatpush1.bf16.msra.mxu0 0
    %1472 = vmatprep.subr.bf16.mxu0 0
    %1473 = vmatpush1.bf16.msra.mxu0 0
    %1474 = vmatprep.subr.bf16.mxu0 0
    %1475 = vmatpush1.bf16.msra.mxu0 0
    %1476 = vmatprep.subr.bf16.mxu0 0
    %1477 = vmatpush1.bf16.msra.mxu0 0
    %1478 = vmatprep.subr.bf16.mxu0 0
    %1479 = vmatpush1.bf16.msra.mxu0 0
    %1480 = vmatprep.subr.bf16.mxu0 0
    %1481 = vmatpush1.bf16.msra.mxu0 0
    %1482 = vmatprep.subr.bf16.mxu0 0
    %1483 = vmatpush1.bf16.msra.mxu0 0
    %1484 = vmatprep.subr.bf16.mxu0 0
    %1485 = vmatpush1.bf16.msra.mxu0 0
    %1486 = vmatprep.subr.bf16.mxu0 0
    %1487 = vmatpush1.bf16.msra.mxu0 0
    %1488 = vmatprep.subr.bf16.mxu0 0
    %1489 = vmatpush1.bf16.msra.mxu0 0
    %1490 = vmatprep.subr.bf16.mxu0 0
    %1491 = vmatpush1.bf16.msra.mxu0 0
    %1492 = vmatprep.subr.bf16.mxu0 0
    %1493 = vmatpush1.bf16.msra.mxu0 0
    %1494 = vmatprep.subr.bf16.mxu0 0
    %1495 = vmatpush1.bf16.msra.mxu0 0
    %1496 = vmatprep.subr.bf16.mxu0 0
    %1497 = vmatpush1.bf16.msra.mxu0 0
    %1498 = vmatprep.subr.bf16.mxu0 0
    %1499 = vmatpush1.bf16.msra.mxu0 0
    %1500 = vmatprep.mubr.bf16.mxu0 0
    %1501 = vmatmul.mubr.bf16.gmra.mrb[0].mxu0 %v1463
    %v1502 = vpop.f32.mrb[0].mxu0
    %v1503 = vadd.f32 0.0, %v1502
    %v1504 = vpop.f32.mrb[0].mxu0
    %v1505 = vpop.f32.mrb[0].mxu0
    %v1506 = vpop.f32.mrb[0].mxu0
    %1507 = vdwg.mxu0
    %1508 = vrot.lane.b32.xlu0 %v1123, 64
    %v1509 = vpop.permute.xlu0 %1508
    %v1511 = vsel %vm56, %v1363, 0
    %v1514 = vsel %vm60, %v1509, 0
    %1516 = vmatprep.subr.bf16.mxu0 0
    %1517 = vmatpush1.bf16.msra.mxu0 %v1514
    %1518 = vmatprep.subr.bf16.mxu0 0
    %1519 = vmatpush1.bf16.msra.mxu0 0
    %1520 = vmatprep.subr.bf16.mxu0 0
    %1521 = vmatpush1.bf16.msra.mxu0 0
    %1522 = vmatprep.subr.bf16.mxu0 0
    %1523 = vmatpush1.bf16.msra.mxu0 0
    %1524 = vmatprep.subr.bf16.mxu0 0
    %1525 = vmatpush1.bf16.msra.mxu0 0
    %1526 = vmatprep.subr.bf16.mxu0 0
    %1527 = vmatpush1.bf16.msra.mxu0 0
    %1528 = vmatprep.subr.bf16.mxu0 0
    %1529 = vmatpush1.bf16.msra.mxu0 0
    %1530 = vmatprep.subr.bf16.mxu0 0
    %1531 = vmatpush1.bf16.msra.mxu0 0
    %1532 = vmatprep.subr.bf16.mxu0 0
    %1533 = vmatpush1.bf16.msra.mxu0 0
    %1534 = vmatprep.subr.bf16.mxu0 0
    %1535 = vmatpush1.bf16.msra.mxu0 0
    %1536 = vmatprep.subr.bf16.mxu0 0
    %1537 = vmatpush1.bf16.msra.mxu0 0
    %1538 = vmatprep.subr.bf16.mxu0 0
    %1539 = vmatpush1.bf16.msra.mxu0 0
    %1540 = vmatprep.subr.bf16.mxu0 0
    %1541 = vmatpush1.bf16.msra.mxu0 0
    %1542 = vmatprep.subr.bf16.mxu0 0
    %1543 = vmatpush1.bf16.msra.mxu0 0
    %1544 = vmatprep.subr.bf16.mxu0 0
    %1545 = vmatpush1.bf16.msra.mxu0 0
    %1546 = vmatprep.subr.bf16.mxu0 0
    %1547 = vmatpush1.bf16.msra.mxu0 0
    %1548 = vmatprep.mubr.bf16.mxu0 0
    %1549 = vmatmul.mubr.bf16.gmra.mrb[0].mxu0 %v1511
    %v1550 = vpop.f32.mrb[0].mxu0
    %v1551 = vadd.f32 0.0, %v1550
    %v1552 = vpop.f32.mrb[0].mxu0
    %v1553 = vpop.f32.mrb[0].mxu0
    %v1554 = vpop.f32.mrb[0].mxu0
    %1555 = vdwg.mxu0
    %s1556 = scalar_lea.vmem %s6, 16
    %v1557 = vld [vmem:[%s1556] sm:$0xf]
    %v1558 = vld [vmem:[%s1556 + $0x4] sm:$0xf]
    %v1559 = vld [vmem:[%s1556 + $0x8] sm:$0xf]
    %v1560 = vld [vmem:[%s1556 + $0xc] sm:$0xf]
    %s1561 = scalar_lea.vmem %s7, 16
    %v1562 = vld [vmem:[%s1561] sm:$0xf]
    %v1563 = vld [vmem:[%s1561 + $0x4] sm:$0xf]
    %v1564 = vld [vmem:[%s1561 + $0x8] sm:$0xf]
    %v1565 = vld [vmem:[%s1561 + $0xc] sm:$0xf]
    %s1566 = scalar_lea.vmem %s8, 1
    %v1567 = vld [vmem:[%s1566] sm:$0x1]
    %s1568 = scalar_lea.vmem %s9, 64
    %v1569 = vld [vmem:[%s1568] sm:$0xf]
    %v1570 = vld [vmem:[%s1568 + $0x4] sm:$0xf]
    %v1571 = vld [vmem:[%s1568 + $0x8] sm:$0xf]
    %v1572 = vld [vmem:[%s1568 + $0xc] sm:$0xf]
    %v1573 = vld [vmem:[%s1568 + $0x10] sm:$0xf]
    %v1574 = vld [vmem:[%s1568 + $0x14] sm:$0xf]
    %v1575 = vld [vmem:[%s1568 + $0x18] sm:$0xf]
    %v1576 = vld [vmem:[%s1568 + $0x1c] sm:$0xf]
    %v1577 = vld [vmem:[%s1568 + $0x20] sm:$0xf]
    %v1578 = vld [vmem:[%s1568 + $0x24] sm:$0xf]
    %v1579 = vld [vmem:[%s1568 + $0x28] sm:$0xf]
    %v1580 = vld [vmem:[%s1568 + $0x2c] sm:$0xf]
    %v1581 = vld [vmem:[%s1568 + $0x30] sm:$0xf]
    %v1582 = vld [vmem:[%s1568 + $0x34] sm:$0xf]
    %v1583 = vld [vmem:[%s1568 + $0x38] sm:$0xf]
    %v1584 = vld [vmem:[%s1568 + $0x3c] sm:$0xf]
    %v1585 = vpack.c.bf16 %v1407, %v1407
    %v1586 = vpack.c.bf16 %v1455, %v1455
    %v1587 = vpack.c.bf16 %v1503, %v1503
    %v1588 = vpack.c.bf16 %v1551, %v1551
    %v1590 = vsel %vm56, %v1585, 0
    %v1593 = vsel %vm60, %v1557, 0
    %1595 = vmatprep.subr.bf16.mxu0 0
    %1596 = vmatpush1.bf16.msra.mxu0 %v1593
    %1597 = vmatprep.subr.bf16.mxu0 0
    %1598 = vmatpush1.bf16.msra.mxu0 0
    %1599 = vmatprep.subr.bf16.mxu0 0
    %1600 = vmatpush1.bf16.msra.mxu0 0
    %1601 = vmatprep.subr.bf16.mxu0 0
    %1602 = vmatpush1.bf16.msra.mxu0 0
    %1603 = vmatprep.subr.bf16.mxu0 0
    %1604 = vmatpush1.bf16.msra.mxu0 0
    %1605 = vmatprep.subr.bf16.mxu0 0
    %1606 = vmatpush1.bf16.msra.mxu0 0
    %1607 = vmatprep.subr.bf16.mxu0 0
    %1608 = vmatpush1.bf16.msra.mxu0 0
    %1609 = vmatprep.subr.bf16.mxu0 0
    %1610 = vmatpush1.bf16.msra.mxu0 0
    %1611 = vmatprep.subr.bf16.mxu0 0
    %1612 = vmatpush1.bf16.msra.mxu0 0
    %1613 = vmatprep.subr.bf16.mxu0 0
    %1614 = vmatpush1.bf16.msra.mxu0 0
    %1615 = vmatprep.subr.bf16.mxu0 0
    %1616 = vmatpush1.bf16.msra.mxu0 0
    %1617 = vmatprep.subr.bf16.mxu0 0
    %1618 = vmatpush1.bf16.msra.mxu0 0
    %1619 = vmatprep.subr.bf16.mxu0 0
    %1620 = vmatpush1.bf16.msra.mxu0 0
    %1621 = vmatprep.subr.bf16.mxu0 0
    %1622 = vmatpush1.bf16.msra.mxu0 0
    %1623 = vmatprep.subr.bf16.mxu0 0
    %1624 = vmatpush1.bf16.msra.mxu0 0
    %1625 = vmatprep.subr.bf16.mxu0 0
    %1626 = vmatpush1.bf16.msra.mxu0 0
    %1627 = vmatprep.mubr.bf16.mxu0 0
    %1628 = vmatmul.mubr.bf16.gmra.mrb[0].mxu0 %v1590
    %v1629 = vpop.f32.mrb[0].mxu0
    %v1630 = vadd.f32 0.0, %v1629
    %v1631 = vpop.f32.mrb[0].mxu0
    %v1632 = vpop.f32.mrb[0].mxu0
    %v1633 = vpop.f32.mrb[0].mxu0
    %1634 = vdwg.mxu0
    %v1636 = vsel %vm56, %v1586, 0
    %v1639 = vsel %vm60, %v1558, 0
    %1641 = vmatprep.subr.bf16.mxu0 0
    %1642 = vmatpush1.bf16.msra.mxu0 %v1639
    %1643 = vmatprep.subr.bf16.mxu0 0
    %1644 = vmatpush1.bf16.msra.mxu0 0
    %1645 = vmatprep.subr.bf16.mxu0 0
    %1646 = vmatpush1.bf16.msra.mxu0 0
    %1647 = vmatprep.subr.bf16.mxu0 0
    %1648 = vmatpush1.bf16.msra.mxu0 0
    %1649 = vmatprep.subr.bf16.mxu0 0
    %1650 = vmatpush1.bf16.msra.mxu0 0
    %1651 = vmatprep.subr.bf16.mxu0 0
    %1652 = vmatpush1.bf16.msra.mxu0 0
    %1653 = vmatprep.subr.bf16.mxu0 0
    %1654 = vmatpush1.bf16.msra.mxu0 0
    %1655 = vmatprep.subr.bf16.mxu0 0
    %1656 = vmatpush1.bf16.msra.mxu0 0
    %1657 = vmatprep.subr.bf16.mxu0 0
    %1658 = vmatpush1.bf16.msra.mxu0 0
    %1659 = vmatprep.subr.bf16.mxu0 0
    %1660 = vmatpush1.bf16.msra.mxu0 0
    %1661 = vmatprep.subr.bf16.mxu0 0
    %1662 = vmatpush1.bf16.msra.mxu0 0
    %1663 = vmatprep.subr.bf16.mxu0 0
    %1664 = vmatpush1.bf16.msra.mxu0 0
    %1665 = vmatprep.subr.bf16.mxu0 0
    %1666 = vmatpush1.bf16.msra.mxu0 0
    %1667 = vmatprep.subr.bf16.mxu0 0
    %1668 = vmatpush1.bf16.msra.mxu0 0
    %1669 = vmatprep.subr.bf16.mxu0 0
    %1670 = vmatpush1.bf16.msra.mxu0 0
    %1671 = vmatprep.subr.bf16.mxu0 0
    %1672 = vmatpush1.bf16.msra.mxu0 0
    %1673 = vmatprep.mubr.bf16.mxu0 0
    %1674 = vmatmul.mubr.bf16.gmra.mrb[0].mxu0 %v1636
    %v1675 = vpop.f32.mrb[0].mxu0
    %v1676 = vadd.f32 0.0, %v1675
    %v1677 = vpop.f32.mrb[0].mxu0
    %v1678 = vpop.f32.mrb[0].mxu0
    %v1679 = vpop.f32.mrb[0].mxu0
    %1680 = vdwg.mxu0
    %v1682 = vsel %vm56, %v1587, 0
    %v1685 = vsel %vm60, %v1559, 0
    %1687 = vmatprep.subr.bf16.mxu0 0
    %1688 = vmatpush1.bf16.msra.mxu0 %v1685
    %1689 = vmatprep.subr.bf16.mxu0 0
    %1690 = vmatpush1.bf16.msra.mxu0 0
    %1691 = vmatprep.subr.bf16.mxu0 0
    %1692 = vmatpush1.bf16.msra.mxu0 0
    %1693 = vmatprep.subr.bf16.mxu0 0
    %1694 = vmatpush1.bf16.msra.mxu0 0
    %1695 = vmatprep.subr.bf16.mxu0 0
    %1696 = vmatpush1.bf16.msra.mxu0 0
    %1697 = vmatprep.subr.bf16.mxu0 0
    %1698 = vmatpush1.bf16.msra.mxu0 0
    %1699 = vmatprep.subr.bf16.mxu0 0
    %1700 = vmatpush1.bf16.msra.mxu0 0
    %1701 = vmatprep.subr.bf16.mxu0 0
    %1702 = vmatpush1.bf16.msra.mxu0 0
    %1703 = vmatprep.subr.bf16.mxu0 0
    %1704 = vmatpush1.bf16.msra.mxu0 0
    %1705 = vmatprep.subr.bf16.mxu0 0
    %1706 = vmatpush1.bf16.msra.mxu0 0
    %1707 = vmatprep.subr.bf16.mxu0 0
    %1708 = vmatpush1.bf16.msra.mxu0 0
    %1709 = vmatprep.subr.bf16.mxu0 0
    %1710 = vmatpush1.bf16.msra.mxu0 0
    %1711 = vmatprep.subr.bf16.mxu0 0
    %1712 = vmatpush1.bf16.msra.mxu0 0
    %1713 = vmatprep.subr.bf16.mxu0 0
    %1714 = vmatpush1.bf16.msra.mxu0 0
    %1715 = vmatprep.subr.bf16.mxu0 0
    %1716 = vmatpush1.bf16.msra.mxu0 0
    %1717 = vmatprep.subr.bf16.mxu0 0
    %1718 = vmatpush1.bf16.msra.mxu0 0
    %1719 = vmatprep.mubr.bf16.mxu0 0
    %1720 = vmatmul.mubr.bf16.gmra.mrb[0].mxu0 %v1682
    %v1721 = vpop.f32.mrb[0].mxu0
    %v1722 = vadd.f32 0.0, %v1721
    %v1723 = vpop.f32.mrb[0].mxu0
    %v1724 = vpop.f32.mrb[0].mxu0
    %v1725 = vpop.f32.mrb[0].mxu0
    %1726 = vdwg.mxu0
    %v1728 = vsel %vm56, %v1588, 0
    %v1731 = vsel %vm60, %v1560, 0
    %1733 = vmatprep.subr.bf16.mxu0 0
    %1734 = vmatpush1.bf16.msra.mxu0 %v1731
    %1735 = vmatprep.subr.bf16.mxu0 0
    %1736 = vmatpush1.bf16.msra.mxu0 0
    %1737 = vmatprep.subr.bf16.mxu0 0
    %1738 = vmatpush1.bf16.msra.mxu0 0
    %1739 = vmatprep.subr.bf16.mxu0 0
    %1740 = vmatpush1.bf16.msra.mxu0 0
    %1741 = vmatprep.subr.bf16.mxu0 0
    %1742 = vmatpush1.bf16.msra.mxu0 0
    %1743 = vmatprep.subr.bf16.mxu0 0
    %1744 = vmatpush1.bf16.msra.mxu0 0
    %1745 = vmatprep.subr.bf16.mxu0 0
    %1746 = vmatpush1.bf16.msra.mxu0 0
    %1747 = vmatprep.subr.bf16.mxu0 0
    %1748 = vmatpush1.bf16.msra.mxu0 0
    %1749 = vmatprep.subr.bf16.mxu0 0
    %1750 = vmatpush1.bf16.msra.mxu0 0
    %1751 = vmatprep.subr.bf16.mxu0 0
    %1752 = vmatpush1.bf16.msra.mxu0 0
    %1753 = vmatprep.subr.bf16.mxu0 0
    %1754 = vmatpush1.bf16.msra.mxu0 0
    %1755 = vmatprep.subr.bf16.mxu0 0
    %1756 = vmatpush1.bf16.msra.mxu0 0
    %1757 = vmatprep.subr.bf16.mxu0 0
    %1758 = vmatpush1.bf16.msra.mxu0 0
    %1759 = vmatprep.subr.bf16.mxu0 0
    %1760 = vmatpush1.bf16.msra.mxu0 0
    %1761 = vmatprep.subr.bf16.mxu0 0
    %1762 = vmatpush1.bf16.msra.mxu0 0
    %1763 = vmatprep.subr.bf16.mxu0 0
    %1764 = vmatpush1.bf16.msra.mxu0 0
    %1765 = vmatprep.mubr.bf16.mxu0 0
    %1766 = vmatmul.mubr.bf16.gmra.mrb[0].mxu0 %v1728
    %v1767 = vpop.f32.mrb[0].mxu0
    %v1768 = vadd.f32 0.0, %v1767
    %v1769 = vpop.f32.mrb[0].mxu0
    %v1770 = vpop.f32.mrb[0].mxu0
    %v1771 = vpop.f32.mrb[0].mxu0
    %1772 = vdwg.mxu0
    %v1773 = vsel %vm131, %v1630, 0.0
    %v1774 = vsel %vm131, %v1676, 0.0
    %v1775 = vadd.f32 %v1773, %v1774
    %v1776 = vsel %vm131, %v1722, 0.0
    %v1777 = vadd.f32 %v1775, %v1776
    %v1778 = vsel %vm131, %v1768, 0.0
    %v1779 = vadd.f32 %v1777, %v1778
    %v1780 = vlaneseq
    %v1781 = vshrl.u32 %v1780, 7
    %v1782 = vsub.s32 0, %v1781
    %v1783 = vrot.slane %v1046, %v1782
    %v1784 = vadd.f32 %v1779, %v1783
    %v1785 = vadd.f32 %v1044, %v1784
    %v1786 = vsel %vm131, %v1785, 0.0
    %1787 = vadd.xlane.f32.xlu0 %v1786
    %v1788 = vpop.xlane.xlu0 %1787
    %v1789 = vmul.f32 %v1788, %v844
    %v1790 = vsub.f32 %v1785, %v1789
    %v1791 = vmul.f32 %v1790, %v1790
    %v1792 = vsel %vm131, %v1791, 0.0
    %1793 = vadd.xlane.f32.xlu0 %v1792
    %v1794 = vpop.xlane.xlu0 %1793
    %v1795 = vmul.f32 %v1794, %v844
    %v1796 = vadd.f32 %v1795, 1e-05
    %v1797 = vrsqrt.pop %v1796
    %v1798 = vmul.f32 %v1790, %v1797
    %v1799 = vlaneseq
    %v1800 = vshrl.u32 %v1799, 7
    %v1801 = vsub.s32 1, %v1800
    %v1802 = vrot.slane %v1046, %v1801
    %v1803 = vmul.f32 %v1798, %v1802
    %v1804 = vlaneseq
    %v1805 = vshrl.u32 %v1804, 7
    %v1806 = vsub.s32 2, %v1805
    %v1807 = vrot.slane %v1046, %v1806
    %v1808 = vadd.f32 %v1803, %v1807
    %v1809 = vpack.c.bf16 %v1808, %v1808
    %v1811 = vlaneseq
    %v1812 = vshrl.u32 %v1811, 7
    %v1813 = vsub.s32 0, %v1812
    %v1814 = vrot.slane %v1567, %v1813
    %v1820 = vunpack.c.l.b16 %v1562
    %v1821 = vunpack.c.l.b16 %v1563
    %v1822 = vunpack.c.l.b16 %v1564
    %v1823 = vunpack.c.l.b16 %v1565
    %v1824 = vpack.c.b16 %v1821, %v1820
    %v1825 = vpack.c.b16 %v1823, %v1822
    %v1829 = vsel %vm131, %v1809, 0
    %1831 = vmatprep.subr.bf16.mxu0 0
    %1832 = vmatpush1.bf16.msra.mxu0 %v1824
    %1833 = vmatprep.subr.bf16.mxu0 0
    %1834 = vmatpush1.bf16.msra.mxu0 %v1825
    %1835 = vmatprep.subr.bf16.mxu0 0
    %1836 = vmatpush1.bf16.msra.mxu0 0
    %1837 = vmatprep.subr.bf16.mxu0 0
    %1838 = vmatpush1.bf16.msra.mxu0 0
    %1839 = vmatprep.subr.bf16.mxu0 0
    %1840 = vmatpush1.bf16.msra.mxu0 0
    %1841 = vmatprep.subr.bf16.mxu0 0
    %1842 = vmatpush1.bf16.msra.mxu0 0
    %1843 = vmatprep.subr.bf16.mxu0 0
    %1844 = vmatpush1.bf16.msra.mxu0 0
    %1845 = vmatprep.subr.bf16.mxu0 0
    %1846 = vmatpush1.bf16.msra.mxu0 0
    %1847 = vmatprep.subr.bf16.mxu0 0
    %1848 = vmatpush1.bf16.msra.mxu0 0
    %1849 = vmatprep.subr.bf16.mxu0 0
    %1850 = vmatpush1.bf16.msra.mxu0 0
    %1851 = vmatprep.subr.bf16.mxu0 0
    %1852 = vmatpush1.bf16.msra.mxu0 0
    %1853 = vmatprep.subr.bf16.mxu0 0
    %1854 = vmatpush1.bf16.msra.mxu0 0
    %1855 = vmatprep.subr.bf16.mxu0 0
    %1856 = vmatpush1.bf16.msra.mxu0 0
    %1857 = vmatprep.subr.bf16.mxu0 0
    %1858 = vmatpush1.bf16.msra.mxu0 0
    %1859 = vmatprep.subr.bf16.mxu0 0
    %1860 = vmatpush1.bf16.msra.mxu0 0
    %1861 = vmatprep.subr.bf16.mxu0 0
    %1862 = vmatpush1.bf16.msra.mxu0 0
    %1863 = vmatprep.mubr.bf16.mxu0 0
    %1864 = vmatmul.mubr.bf16.gmra.mrb[0].mxu0 %v1829
    %v1865 = vpop.f32.mrb[0].mxu0
    %v1866 = vadd.f32 %v1814, %v1865
    %v1867 = vpop.f32.mrb[0].mxu0
    %v1868 = vpop.f32.mrb[0].mxu0
    %v1869 = vpop.f32.mrb[0].mxu0
    %1870 = vdwg.mxu0
    %v1871 = vmax.f32 %v1866, 0.0
    %v1872 = vpack.c.bf16 %v1871, %v1871
    %v1873 = vlaneseq
    %v1874 = vshrl.u32 %v1873, 7
    %v1875 = vsub.s32 5, %v1874
    %v1876 = vrot.slane %v1046, %v1875
    %v1893 = vunpack.c.l.b16 %v1569
    %v1894 = vunpack.c.l.b16 %v1570
    %v1895 = vunpack.c.l.b16 %v1571
    %v1896 = vunpack.c.l.b16 %v1572
    %v1897 = vunpack.c.l.b16 %v1573
    %v1898 = vunpack.c.l.b16 %v1574
    %v1899 = vunpack.c.l.b16 %v1575
    %v1900 = vunpack.c.l.b16 %v1576
    %v1901 = vunpack.c.l.b16 %v1577
    %v1902 = vunpack.c.l.b16 %v1578
    %v1903 = vunpack.c.l.b16 %v1579
    %v1904 = vunpack.c.l.b16 %v1580
    %v1905 = vunpack.c.l.b16 %v1581
    %v1906 = vunpack.c.l.b16 %v1582
    %v1907 = vunpack.c.l.b16 %v1583
    %v1908 = vunpack.c.l.b16 %v1584
    %v1909 = vpack.c.b16 %v1894, %v1893
    %v1910 = vpack.c.b16 %v1896, %v1895
    %v1911 = vpack.c.b16 %v1898, %v1897
    %v1912 = vpack.c.b16 %v1900, %v1899
    %v1913 = vpack.c.b16 %v1902, %v1901
    %v1914 = vpack.c.b16 %v1904, %v1903
    %v1915 = vpack.c.b16 %v1906, %v1905
    %v1916 = vpack.c.b16 %v1908, %v1907
    %1925 = vmatprep.subr.bf16.mxu0 0
    %1926 = vmatpush1.bf16.msra.mxu0 %v1909
    %1927 = vmatprep.subr.bf16.mxu0 0
    %1928 = vmatpush1.bf16.msra.mxu0 %v1910
    %1929 = vmatprep.subr.bf16.mxu0 0
    %1930 = vmatpush1.bf16.msra.mxu0 %v1911
    %1931 = vmatprep.subr.bf16.mxu0 0
    %1932 = vmatpush1.bf16.msra.mxu0 %v1912
    %1933 = vmatprep.subr.bf16.mxu0 0
    %1934 = vmatpush1.bf16.msra.mxu0 %v1913
    %1935 = vmatprep.subr.bf16.mxu0 0
    %1936 = vmatpush1.bf16.msra.mxu0 %v1914
    %1937 = vmatprep.subr.bf16.mxu0 0
    %1938 = vmatpush1.bf16.msra.mxu0 %v1915
    %1939 = vmatprep.subr.bf16.mxu0 0
    %1940 = vmatpush1.bf16.msra.mxu0 %v1916
    %1941 = vmatprep.subr.bf16.mxu0 0
    %1942 = vmatpush1.bf16.msra.mxu0 0
    %1943 = vmatprep.subr.bf16.mxu0 0
    %1944 = vmatpush1.bf16.msra.mxu0 0
    %1945 = vmatprep.subr.bf16.mxu0 0
    %1946 = vmatpush1.bf16.msra.mxu0 0
    %1947 = vmatprep.subr.bf16.mxu0 0
    %1948 = vmatpush1.bf16.msra.mxu0 0
    %1949 = vmatprep.subr.bf16.mxu0 0
    %1950 = vmatpush1.bf16.msra.mxu0 0
    %1951 = vmatprep.subr.bf16.mxu0 0
    %1952 = vmatpush1.bf16.msra.mxu0 0
    %1953 = vmatprep.subr.bf16.mxu0 0
    %1954 = vmatpush1.bf16.msra.mxu0 0
    %1955 = vmatprep.subr.bf16.mxu0 0
    %1956 = vmatpush1.bf16.msra.mxu0 0
    %1957 = vmatprep.mubr.bf16.mxu0 0
    %1958 = vmatmul.mubr.bf16.gmra.mrb[0].mxu0 %v1872
    %v1959 = vpop.f32.mrb[0].mxu0
    %v1960 = vadd.f32 %v1876, %v1959
    %v1961 = vpop.f32.mrb[0].mxu0
    %v1962 = vpop.f32.mrb[0].mxu0
    %v1963 = vpop.f32.mrb[0].mxu0
    %1964 = vdwg.mxu0
    %v1965 = vadd.f32 %v1808, %v1960
    %v1966 = vsel %vm131, %v1965, 0.0
    %1967 = vadd.xlane.f32.xlu0 %v1966
    %v1968 = vpop.xlane.xlu0 %1967
    %v1969 = vmul.f32 %v1968, %v844
    %v1970 = vsub.f32 %v1965, %v1969
    %v1971 = vmul.f32 %v1970, %v1970
    %v1972 = vsel %vm131, %v1971, 0.0
    %1973 = vadd.xlane.f32.xlu0 %v1972
    %v1974 = vpop.xlane.xlu0 %1973
    %v1975 = vmul.f32 %v1974, %v844
    %v1976 = vadd.f32 %v1975, 1e-05
    %v1977 = vrsqrt.pop %v1976
    %v1978 = vmul.f32 %v1970, %v1977
    %v1979 = vlaneseq
    %v1980 = vshrl.u32 %v1979, 7
    %v1981 = vsub.s32 3, %v1980
    %v1982 = vrot.slane %v1046, %v1981
    %v1983 = vmul.f32 %v1978, %v1982
    %v1984 = vlaneseq
    %v1985 = vshrl.u32 %v1984, 7
    %v1986 = vsub.s32 4, %v1985
    %v1987 = vrot.slane %v1046, %v1986
    %v1988 = vadd.f32 %v1983, %v1987
    %v1989 = vpack.c.bf16 %v1988, %v1988
    %v1990 = vld [vmem:[%s11] sm:$0xf]
    %v1991 = vld [vmem:[%s11 + $0x4] sm:$0xf]
    %v1992 = vld [vmem:[%s11 + $0x8] sm:$0xf]
    %v1993 = vld [vmem:[%s11 + $0xc] sm:$0xf]
    %v1994 = vld [vmem:[%s12] sm:$0x1]
    %v1996 = vlaneseq
    %v1997 = vshrl.u32 %v1996, 7
    %v1998 = vsub.s32 0, %v1997
    %v1999 = vrot.slane %v1994, %v1998
    %v2005 = vunpack.c.l.b16 %v1990
    %v2006 = vunpack.c.l.b16 %v1991
    %v2007 = vunpack.c.l.b16 %v1992
    %v2008 = vunpack.c.l.b16 %v1993
    %v2009 = vpack.c.b16 %v2006, %v2005
    %v2010 = vpack.c.b16 %v2008, %v2007
    %v2014 = vsel %vm131, %v1989, 0
    %2016 = vmatprep.subr.bf16.mxu0 0
    %2017 = vmatpush1.bf16.msra.mxu0 %v2009
    %2018 = vmatprep.subr.bf16.mxu0 0
    %2019 = vmatpush1.bf16.msra.mxu0 %v2010
    %2020 = vmatprep.subr.bf16.mxu0 0
    %2021 = vmatpush1.bf16.msra.mxu0 0
    %2022 = vmatprep.subr.bf16.mxu0 0
    %2023 = vmatpush1.bf16.msra.mxu0 0
    %2024 = vmatprep.subr.bf16.mxu0 0
    %2025 = vmatpush1.bf16.msra.mxu0 0
    %2026 = vmatprep.subr.bf16.mxu0 0
    %2027 = vmatpush1.bf16.msra.mxu0 0
    %2028 = vmatprep.subr.bf16.mxu0 0
    %2029 = vmatpush1.bf16.msra.mxu0 0
    %2030 = vmatprep.subr.bf16.mxu0 0
    %2031 = vmatpush1.bf16.msra.mxu0 0
    %2032 = vmatprep.subr.bf16.mxu0 0
    %2033 = vmatpush1.bf16.msra.mxu0 0
    %2034 = vmatprep.subr.bf16.mxu0 0
    %2035 = vmatpush1.bf16.msra.mxu0 0
    %2036 = vmatprep.subr.bf16.mxu0 0
    %2037 = vmatpush1.bf16.msra.mxu0 0
    %2038 = vmatprep.subr.bf16.mxu0 0
    %2039 = vmatpush1.bf16.msra.mxu0 0
    %2040 = vmatprep.subr.bf16.mxu0 0
    %2041 = vmatpush1.bf16.msra.mxu0 0
    %2042 = vmatprep.subr.bf16.mxu0 0
    %2043 = vmatpush1.bf16.msra.mxu0 0
    %2044 = vmatprep.subr.bf16.mxu0 0
    %2045 = vmatpush1.bf16.msra.mxu0 0
    %2046 = vmatprep.subr.bf16.mxu0 0
    %2047 = vmatpush1.bf16.msra.mxu0 0
    %2048 = vmatprep.mubr.bf16.mxu0 0
    %2049 = vmatmul.mubr.bf16.gmra.mrb[0].mxu0 %v2014
    %v2050 = vpop.f32.mrb[0].mxu0
    %v2051 = vadd.f32 %v1999, %v2050
    %v2052 = vpop.f32.mrb[0].mxu0
    %v2053 = vpop.f32.mrb[0].mxu0
    %v2054 = vpop.f32.mrb[0].mxu0
    %2055 = vdwg.mxu0
    %2056 = vst [vmem:[#allocation2] sm:$0xff] %v2051
    // Predicated region
    $region54: #{tpu_custom_call.1} parent=1 // pred_check
      _
    $region55: #{tpu_custom_call.1} parent=1 // pred_check_branch
      %2058 = sbr.rel (0) target = $region57
    $region56: #{tpu_custom_call.1} parent=1 // pred_region
      %s2060 = ssub.s32 128, 128
      %2061 = vsyncadd [#allocation3], %s2060
      %s2063 = sshll.u32 [#allocation2], 4
      %s2064 = int_to_ptr.vmem [resolvable:$true] %s2063
      %2066 = dma.vmem_to_hbm [thread:$0]  %s2064, 128, %s13, [#allocation3]
    $region57: #{tpu_custom_call.1} parent=1 // pred_fallthru
      _
    // Predicated region
    $region58: #{tpu_custom_call.1} parent=1 // pred_check
      _
    $region59: #{tpu_custom_call.1} parent=1 // pred_check_branch
      %2068 = sbr.rel (0) target = $region61
    $region60: #{tpu_custom_call.1} parent=1 // pred_region
      %2069 = dma.done [#allocation3], 128
    $region61: #{tpu_custom_call.1} parent=1 // pred_fallthru
      _
    %2070 = vsyncpa [#allocation3], 1

</llo_original>
